<compile_context>
chip_gen: v7x
topology: tpu7x:2x2x1
jax: 0.10.0
libtpu: 0.0.40
codegen_flags: <defaults>
</compile_context>

<pallas_src>
import jax
import jax.numpy as jnp
import numpy as np
from jax import lax
from jax.experimental import pallas as pl
from jax.experimental.pallas import tpu as pltpu

# ---- small synthetic T5-encoder config (true model dims) --------------------
VOCAB = 100
D_MODEL = 32          # d_model
N_HEADS = 4
D_KV = 8              # per-head dim
HD = N_HEADS * D_KV   # 32
D_FF = 64
N_LAYERS = 2
NUM_BUCKETS = 32
MAX_DISTANCE = 128
EPS = 1e-6            # T5 LayerNorm eps
NEG_INF = -1e9

# ---- lane-dense padded dims (zero-padded, last dim = 128) -------------------
DP = 128              # padded d_model
FP = 128              # padded d_ff


# ---------------------------------------------------------------------------
# Pallas kernel: one T5 encoder block per grid step, hidden resident in VMEM
# ---------------------------------------------------------------------------
def _rmsnorm(x, w):
    # T5 LayerNorm (RMSNorm).  Padded lanes of x are exactly zero, so summing
    # over the 128-wide padded axis and dividing by the true D_MODEL is exact.
    var = jnp.sum(x * x, axis=-1, keepdims=True) * (1.0 / D_MODEL)
    return x * lax.rsqrt(var + EPS) * w


def _t5_encoder_kernel(hin_ref, bias_ref, mask_ref, ln1_ref, wqkv_ref, wo_ref,
                       ln2_ref, wi_ref, woff_ref, lnf_ref, out_ref, hid_ref):
    """hin_ref : (B*S, DP) f32   initial (padded) embeddings
       bias_ref: (H, S, S) f32   shared relative-position bias
       mask_ref: (B, S)    f32   additive key-padding mask ((1-mask)*-1e9)
       ln1/ln2 : (1, DP)   f32   per-layer RMSNorm weights (layer-sliced)
       wqkv_ref: (3*H*D_KV, DP) bf16   fused, weight-major QKV projection
       wo_ref  : (H, D_KV, DP)  bf16   per-head output projection
       wi_ref  : (DP, FP) bf16,  woff_ref: (FP, DP) bf16   FFN
       lnf_ref : (1, DP) f32     final RMSNorm weight
       out_ref : (B*S, DP) f32   encoder output (lane-dense)
       hid_ref : (B*S, DP) f32   VMEM scratch, persists across the layer grid
    """
    layer = pl.program_id(0)
    B, S = mask_ref.shape

    @pl.when(layer == 0)
    def _init():
        hid_ref[...] = hin_ref[...]

    # ---------------- self-attention (pre-RMSNorm, no 1/sqrt(dk)) -----------
    x = hid_ref[...]                                    # (B*S, DP) f32
    n1 = _rmsnorm(x, ln1_ref[...])
    # fused QKV projection, weight-major so the head dim comes out leading:
    #   (3*H*Dk, DP) x (B*S, DP)^T -> (3*H*Dk, B*S)
    qkv_t = lax.dot_general(wqkv_ref[...], n1.astype(jnp.bfloat16),
                            (((1,), (1,)), ((), ())),
                            preferred_element_type=jnp.float32)
    qkv_t = qkv_t.reshape(3 * N_HEADS, D_KV, B * S)
    q_all = jnp.swapaxes(qkv_t[:N_HEADS], 1, 2)         # (H, B*S, D_KV)
    k_all = qkv_t[N_HEADS:2 * N_HEADS]                  # (H, D_KV, B*S)
    v_all = qkv_t[2 * N_HEADS:]                         # (H, D_KV, B*S)

    pos_bias = bias_ref[...]                            # (H, S, S) f32
    mask_add = mask_ref[...]                            # (B, S) f32
    wo = wo_ref[...]                                    # (H, D_KV, DP) bf16

    # Per-batch attention: scores are (H, S, S) per batch element (no
    # cross-batch keys, no block-diagonal bias).  B is tiny here -> static
    # unroll; at large B the batch would move onto a parallel grid axis.
    for b in range(B):
        lo = b * S
        qb = q_all[:, lo:lo + S, :].astype(jnp.bfloat16)   # (H, S, D_KV)
        kb = k_all[:, :, lo:lo + S].astype(jnp.bfloat16)   # (H, D_KV, S)
        vb = v_all[:, :, lo:lo + S].astype(jnp.bfloat16)   # (H, D_KV, S)

        s = jnp.einsum('hsd,hdt->hst', qb, kb,
                       preferred_element_type=jnp.float32)  # (H, S, S)
        s = s + pos_bias + mask_add[b:b + 1, :][None]       # bias + key mask
        m = jnp.max(s, axis=-1, keepdims=True)
        e = jnp.exp(s - m)
        denom = jnp.sum(e, axis=-1, keepdims=True)

        ctx = jnp.einsum('hst,hdt->hsd', e.astype(jnp.bfloat16), vb,
                         preferred_element_type=jnp.float32)  # (H, S, D_KV)
        # fold 1/denom after the PV matmul; approx reciprocal -> EUP slot
        ctx = ctx * pl.reciprocal(denom, approx=True)

        # head concat folded into a head-batched projection + sum over heads
        attn = jnp.einsum('hsd,hde->hse', ctx.astype(jnp.bfloat16), wo,
                          preferred_element_type=jnp.float32)  # (H, S, DP)
        hid_ref[pl.ds(lo, S), :] = x[lo:lo + S, :] + jnp.sum(attn, axis=0)

    # ---------------- feed-forward (DenseReluDense; dropout = eval no-op) ---
    x = hid_ref[...]
    n2 = _rmsnorm(x, ln2_ref[...])
    h = jnp.dot(n2.astype(jnp.bfloat16), wi_ref[...],
                preferred_element_type=jnp.float32)
    h = jnp.maximum(h, 0.0)
    y = jnp.dot(h.astype(jnp.bfloat16), woff_ref[...],
                preferred_element_type=jnp.float32)
    hid_ref[...] = x + y

    # ---------------- final T5 RMSNorm + lane-dense output write ------------
    @pl.when(layer == pl.num_programs(0) - 1)
    def _final():
        out_ref[...] = _rmsnorm(hid_ref[...], lnf_ref[...])


def t5_encoder_fused(hidden_flat, pos_bias, mask_add, params):
    BS, _ = hidden_flat.shape
    H, S, _ = pos_bias.shape
    B = mask_add.shape[0]
    L = int(params["wqkv_t"].shape[0])

    # advisory cost estimate so XLA schedules the surrounding glue well
    flops = L * (2 * BS * DP * (3 * HD)               # QKV projection
                 + B * H * 2 * S * S * D_KV * 2       # QK^T + PV
                 + 2 * BS * HD * DP                   # output projection
                 + 2 * BS * DP * FP * 2)              # FFN
    transcendentals = L * (B * H * S * S + 3 * BS) + BS
    operands = (hidden_flat, pos_bias, mask_add,
                params["ln1"], params["wqkv_t"], params["wo_h"],
                params["ln2"], params["wi"], params["wo_ff"],
                params["final_ln"])
    bytes_accessed = (sum(int(a.size) * a.dtype.itemsize for a in operands)
                      + BS * DP * 4)

    grid_spec = pltpu.PrefetchScalarGridSpec(
        num_scalar_prefetch=0,
        grid=(L,),
        in_specs=[
            pl.BlockSpec((BS, DP), lambda l: (0, 0)),              # embeddings
            pl.BlockSpec((H, S, S), lambda l: (0, 0, 0)),          # rel-pos bias
            pl.BlockSpec((B, S), lambda l: (0, 0)),                # key mask
            pl.BlockSpec((None, 1, DP), lambda l: (l, 0, 0)),      # ln1[l]
            pl.BlockSpec((None, 3 * HD, DP), lambda l: (l, 0, 0)),  # wqkv[l]
            pl.BlockSpec((None, N_HEADS, D_KV, DP),
                         lambda l: (l, 0, 0, 0)),                  # wo[l]
            pl.BlockSpec((None, 1, DP), lambda l: (l, 0, 0)),      # ln2[l]
            pl.BlockSpec((None, DP, FP), lambda l: (l, 0, 0)),     # wi[l]
            pl.BlockSpec((None, FP, DP), lambda l: (l, 0, 0)),     # wo_ff[l]
            pl.BlockSpec((1, DP), lambda l: (0, 0)),               # final ln
        ],
        out_specs=pl.BlockSpec((BS, DP), lambda l: (0, 0)),
        scratch_shapes=[pltpu.VMEM((BS, DP), jnp.float32)],        # hidden
    )

    return pl.pallas_call(
        _t5_encoder_kernel,
        out_shape=jax.ShapeDtypeStruct((BS, DP), jnp.float32),
        grid_spec=grid_spec,
        compiler_params=pltpu.CompilerParams(
            dimension_semantics=("arbitrary",),
            vmem_limit_bytes=32 * 1024 * 1024),
        cost_estimate=pl.CostEstimate(flops=flops,
                                      transcendentals=transcendentals,
                                      bytes_accessed=bytes_accessed),
    )(*operands)


# ---------------------------------------------------------------------------
# JAX glue: relative-position bias, embedding, pooling (no Pallas equivalent)
# ---------------------------------------------------------------------------
def _relative_position_bucket(relative_position,
                              num_buckets=NUM_BUCKETS,
                              max_distance=MAX_DISTANCE):
    # bidirectional bucketing, matching HF T5
    num_buckets //= 2
    buckets = (relative_position > 0).astype(jnp.int32) * num_buckets
    rel = jnp.abs(relative_position)
    max_exact = num_buckets // 2
    is_small = rel < max_exact
    rel_safe = jnp.maximum(rel, 1).astype(jnp.float32)
    rel_if_large = max_exact + (
        jnp.log(rel_safe / max_exact)
        / np.log(max_distance / max_exact)
        * (num_buckets - max_exact)
    ).astype(jnp.int32)
    rel_if_large = jnp.minimum(rel_if_large, num_buckets - 1)
    return buckets + jnp.where(is_small, rel, rel_if_large)


def compute_position_bias(rel_bias_table, seq_len):
    ctx = jnp.arange(seq_len)[:, None]
    mem = jnp.arange(seq_len)[None, :]
    buckets = _relative_position_bucket(mem - ctx)             # (S, S)
    bias = rel_bias_table[buckets]                             # (S, S, H)
    return jnp.transpose(bias, (2, 0, 1)).astype(jnp.float32)  # (H, S, S)


def _pad_last(x, target):
    return jnp.pad(x, [(0, 0)] * (x.ndim - 1) + [(0, target - x.shape[-1])])


def _pad2(x, rows, cols):
    return jnp.pad(x, [(0, rows - x.shape[0]), (0, cols - x.shape[1])])


def init_params(key):
    ks = jax.random.split(key, 2 + 6 * N_LAYERS)

    def rnd(k, shape):
        return 0.02 * jax.random.normal(k, shape, jnp.float32)

    wqkv_t, wo_h, wi_p, woff_p = [], [], [], []
    for li in range(N_LAYERS):
        base = 2 + 6 * li
        wq = rnd(ks[base + 0], (D_MODEL, HD))
        wk = rnd(ks[base + 1], (D_MODEL, HD))
        wv = rnd(ks[base + 2], (D_MODEL, HD))
        wo = rnd(ks[base + 3], (HD, D_MODEL))
        wi = rnd(ks[base + 4], (D_MODEL, D_FF))
        wof = rnd(ks[base + 5], (D_FF, D_MODEL))
        # weight-major fused QKV: rows ordered (q|k|v, head, d_kv)
        wqkv_t.append(_pad_last(jnp.concatenate([wq, wk, wv], axis=1).T, DP))
        # per-head output projection, model dim zero-padded to DP
        wo_h.append(_pad_last(wo.reshape(N_HEADS, D_KV, D_MODEL), DP))
        wi_p.append(_pad2(wi, DP, FP))
        woff_p.append(_pad2(wof, FP, DP))

    ln_row = _pad_last(jnp.ones((1, D_MODEL), jnp.float32), DP)   # (1, DP)
    ln_stack = jnp.tile(ln_row[None], (N_LAYERS, 1, 1))           # (L, 1, DP)

    return {
        "embed": _pad_last(rnd(ks[0], (VOCAB, D_MODEL)), DP),     # (V, DP)
        "rel_bias": rnd(ks[1], (NUM_BUCKETS, N_HEADS)),
        "wqkv_t": jnp.stack(wqkv_t).astype(jnp.bfloat16),         # (L,3*HD,DP)
        "wo_h": jnp.stack(wo_h).astype(jnp.bfloat16),             # (L,H,Dk,DP)
        "wi": jnp.stack(wi_p).astype(jnp.bfloat16),               # (L,DP,FP)
        "wo_ff": jnp.stack(woff_p).astype(jnp.bfloat16),          # (L,FP,DP)
        "ln1": ln_stack,
        "ln2": ln_stack,
        "final_ln": ln_row,
    }


def text_clip_forward(params, input_ids, attention_mask):
    """Mirrors TextCLIP.forward: returns (lm_head(pooled), txt_logits)."""
    B, S = input_ids.shape
    hidden = params["embed"][input_ids].reshape(B * S, DP)         # (B*S, DP)
    pos_bias = compute_position_bias(params["rel_bias"], S)        # (H, S, S)
    mask_add = (1.0 - attention_mask.astype(jnp.float32)) * NEG_INF  # (B, S)

    out_flat = t5_encoder_fused(hidden, pos_bias, mask_add, params)
    txt_logits = out_flat.reshape(B, S, DP)[:, :, :D_MODEL]        # strip pad

    # txt_logits[arange(B), input_ids.argmax(-1)]  (reference CLIP pooling)
    pool_idx = jnp.argmax(input_ids, axis=-1)                      # (B,)
    pooled = txt_logits[jnp.arange(B), pool_idx]                   # (B, D)

    # lm_head: head_type='identy' (default) -> nn.Identity
    return pooled, txt_logits


if __name__ == "__main__":
    key = jax.random.PRNGKey(0)
    pkey, ikey = jax.random.split(key)
    params = init_params(pkey)

    B, S = 2, 8
    input_ids = jax.random.randint(ikey, (B, S), 0, VOCAB, dtype=jnp.int32)
    attention_mask = jnp.ones((B, S), jnp.int32).at[1, 6:].set(0)

    pooled, txt_logits = jax.jit(text_clip_forward)(
        params, input_ids, attention_mask)
    jax.block_until_ready((pooled, txt_logits))

    assert pooled.shape == (B, D_MODEL)
    assert txt_logits.shape == (B, S, D_MODEL)
    assert bool(jnp.all(jnp.isfinite(pooled)))
    assert bool(jnp.all(jnp.isfinite(txt_logits)))
    print("KERNEL_OK")
</pallas_src>

<mosaic_0001>
module attributes {stable_mosaic.version = 11 : i64} {
  func.func @_t5_encoder_kernel(%arg0: i32, %arg1: memref<16x128xf32, #tpu.memory_space<vmem>>, %arg2: memref<4x8x8xf32, #tpu.memory_space<vmem>>, %arg3: memref<2x8xf32, #tpu.memory_space<vmem>>, %arg4: memref<1x1x128xf32, #tpu.memory_space<vmem>>, %arg5: memref<1x96x128xbf16, #tpu.memory_space<vmem>>, %arg6: memref<1x4x8x128xbf16, #tpu.memory_space<vmem>>, %arg7: memref<1x1x128xf32, #tpu.memory_space<vmem>>, %arg8: memref<1x128x128xbf16, #tpu.memory_space<vmem>>, %arg9: memref<1x128x128xbf16, #tpu.memory_space<vmem>>, %arg10: memref<1x128xf32, #tpu.memory_space<vmem>>, %arg11: memref<16x128xf32, #tpu.memory_space<vmem>>, %arg12: memref<16x128xf32, #tpu.memory_space<vmem>>) attributes {dimension_semantics = [#tpu.dimension_semantics<arbitrary>], iteration_bounds = array<i64: 2>, scalar_prefetch = 0 : i64, scratch_operands = 1 : i64, tpu.core_type = #tpu.core_type<tc>, window_params = [{pipeline_mode = #tpu.pipeline_mode<synchronous>, transform_indices = @transform_0, window_bounds = array<i64: 16, 128>}, {pipeline_mode = #tpu.pipeline_mode<synchronous>, transform_indices = @transform_1, window_bounds = array<i64: 4, 8, 8>}, {pipeline_mode = #tpu.pipeline_mode<synchronous>, transform_indices = @transform_2, window_bounds = array<i64: 2, 8>}, {transform_indices = @transform_3, window_bounds = array<i64: 1, 1, 128>}, {transform_indices = @transform_4, window_bounds = array<i64: 1, 96, 128>}, {transform_indices = @transform_5, window_bounds = array<i64: 1, 4, 8, 128>}, {transform_indices = @transform_6, window_bounds = array<i64: 1, 1, 128>}, {transform_indices = @transform_7, window_bounds = array<i64: 1, 128, 128>}, {transform_indices = @transform_8, window_bounds = array<i64: 1, 128, 128>}, {pipeline_mode = #tpu.pipeline_mode<synchronous>, transform_indices = @transform_9, window_bounds = array<i64: 1, 128>}, {pipeline_mode = #tpu.pipeline_mode<synchronous>, transform_indices = @transform_10, window_bounds = array<i64: 16, 128>}]} {
    %c0_i32 = arith.constant 0 : i32
    %0 = arith.cmpi eq, %arg0, %c0_i32 : i32
    %1 = arith.extui %0 : i1 to i32
    %c0_i32_0 = arith.constant 0 : i32
    %2 = arith.cmpi ne, %1, %c0_i32_0 : i32
    scf.if %2 {
      %c0_55 = arith.constant 0 : index
      %c0_56 = arith.constant 0 : index
      %121 = vector.load %arg1[%c0_55, %c0_56] : memref<16x128xf32, #tpu.memory_space<vmem>>, vector<16x128xf32>
      %c0_57 = arith.constant 0 : index
      %c0_58 = arith.constant 0 : index
      %122 = vector.load %arg12[%c0_57, %c0_58] : memref<16x128xf32, #tpu.memory_space<vmem>>, vector<16x128xf32>
      tpu.vector_store %arg12[%c0_57, %c0_58], %121 {strides = array<i32>} : memref<16x128xf32, #tpu.memory_space<vmem>>, vector<16x128xf32>,
    } else {
    }
    %c0 = arith.constant 0 : index
    %c0_1 = arith.constant 0 : index
    %3 = vector.load %arg12[%c0, %c0_1] : memref<16x128xf32, #tpu.memory_space<vmem>>, vector<16x128xf32>
    %c0_2 = arith.constant 0 : index
    %c0_3 = arith.constant 0 : index
    %c0_4 = arith.constant 0 : index
    %4 = vector.load %arg4[%c0_2, %c0_3, %c0_4] : memref<1x1x128xf32, #tpu.memory_space<vmem>>, vector<1x1x128xf32>
    %5 = vector.shape_cast %4 : vector<1x1x128xf32> to vector<1x128xf32>
    %6 = arith.mulf %3, %3 : vector<16x128xf32>
    %cst = arith.constant dense<0.000000e+00> : vector<16xf32>
    %7 = vector.multi_reduction <add>, %6, %cst [1] : vector<16x128xf32> to vector<16xf32>
    %8 = vector.shape_cast %7 : vector<16xf32> to vector<16x1xf32>
    %cst_5 = arith.constant 3.125000e-02 : f32
    %9 = vector.broadcast %cst_5 : f32 to vector<16x1xf32>
    %10 = arith.mulf %8, %9 : vector<16x1xf32>
    %cst_6 = arith.constant 9.99999997E-7 : f32
    %11 = vector.broadcast %cst_6 : f32 to vector<16x1xf32>
    %12 = arith.addf %10, %11 : vector<16x1xf32>
    %13 = math.rsqrt %12 : vector<16x1xf32>
    %14 = vector.broadcast %13 : vector<16x1xf32> to vector<16x128xf32>
    %15 = arith.mulf %3, %14 : vector<16x128xf32>
    %16 = vector.broadcast %5 : vector<1x128xf32> to vector<16x128xf32>
    %17 = arith.mulf %15, %16 : vector<16x128xf32>
    %c0_7 = arith.constant 0 : index
    %c0_8 = arith.constant 0 : index
    %c0_9 = arith.constant 0 : index
    %18 = vector.load %arg5[%c0_7, %c0_8, %c0_9] : memref<1x96x128xbf16, #tpu.memory_space<vmem>>, vector<1x96x128xbf16>
    %19 = vector.shape_cast %18 : vector<1x96x128xbf16> to vector<96x128xbf16>
    %20 = arith.truncf %17 : vector<16x128xf32> to vector<16x128xbf16>
    %cst_10 = arith.constant dense<0.000000e+00> : vector<96x16xf32>
    %21 = tpu.matmul %19, %20, %cst_10 {dimension_numbers = #tpu.dot_dimension_numbers<[1], [1], [0], [0], [0, 0, 1, 0], [], []>} : vector<96x128xbf16>, vector<16x128xbf16>, vector<96x16xf32> -> vector<96x16xf32>
    %22 = vector.shape_cast %21 : vector<96x16xf32> to vector<12x8x16xf32>
    %23 = vector.extract_strided_slice %22 {offsets = [0, 0, 0], sizes = [4, 8, 16], strides = [1, 1, 1]} : vector<12x8x16xf32> to vector<4x8x16xf32>
    %24 = tpu.transpose %23, [0, 2, 1] : vector<4x8x16xf32> -> vector<4x16x8xf32>
    %25 = vector.extract_strided_slice %22 {offsets = [4, 0, 0], sizes = [4, 8, 16], strides = [1, 1, 1]} : vector<12x8x16xf32> to vector<4x8x16xf32>
    %26 = vector.extract_strided_slice %22 {offsets = [8, 0, 0], sizes = [4, 8, 16], strides = [1, 1, 1]} : vector<12x8x16xf32> to vector<4x8x16xf32>
    %c0_11 = arith.constant 0 : index
    %c0_12 = arith.constant 0 : index
    %c0_13 = arith.constant 0 : index
    %27 = vector.load %arg2[%c0_11, %c0_12, %c0_13] : memref<4x8x8xf32, #tpu.memory_space<vmem>>, vector<4x8x8xf32>
    %c0_14 = arith.constant 0 : index
    %c0_15 = arith.constant 0 : index
    %28 = vector.load %arg3[%c0_14, %c0_15] : memref<2x8xf32, #tpu.memory_space<vmem>>, vector<2x8xf32>
    %c0_16 = arith.constant 0 : index
    %c0_17 = arith.constant 0 : index
    %c0_18 = arith.constant 0 : index
    %c0_19 = arith.constant 0 : index
    %29 = vector.load %arg6[%c0_16, %c0_17, %c0_18, %c0_19] : memref<1x4x8x128xbf16, #tpu.memory_space<vmem>>, vector<1x4x8x128xbf16>
    %30 = vector.shape_cast %29 : vector<1x4x8x128xbf16> to vector<4x8x128xbf16>
    %31 = vector.extract_strided_slice %24 {offsets = [0, 0, 0], sizes = [4, 8, 8], strides = [1, 1, 1]} : vector<4x16x8xf32> to vector<4x8x8xf32>
    %32 = arith.truncf %31 : vector<4x8x8xf32> to vector<4x8x8xbf16>
    %33 = vector.extract_strided_slice %25 {offsets = [0, 0, 0], sizes = [4, 8, 8], strides = [1, 1, 1]} : vector<4x8x16xf32> to vector<4x8x8xf32>
    %34 = arith.truncf %33 : vector<4x8x8xf32> to vector<4x8x8xbf16>
    %35 = vector.extract_strided_slice %26 {offsets = [0, 0, 0], sizes = [4, 8, 8], strides = [1, 1, 1]} : vector<4x8x16xf32> to vector<4x8x8xf32>
    %36 = arith.truncf %35 : vector<4x8x8xf32> to vector<4x8x8xbf16>
    "tpu.trace_start"() <{level = 10 : i32, message = "hsd,hdt->hst"}> : () -> ()
    %cst_20 = arith.constant dense<0.000000e+00> : vector<4x8x8xf32>
    %37 = tpu.matmul %32, %34, %cst_20 {dimension_numbers = #tpu.dot_dimension_numbers<[2], [1], [1], [2], [0, 0, 0, 1, 1, 2], [0], [0]>} : vector<4x8x8xbf16>, vector<4x8x8xbf16>, vector<4x8x8xf32> -> vector<4x8x8xf32>
    "tpu.trace_stop"() : () -> ()
    %38 = arith.addf %37, %27 : vector<4x8x8xf32>
    %39 = vector.extract_strided_slice %28 {offsets = [0, 0], sizes = [1, 8], strides = [1, 1]} : vector<2x8xf32> to vector<1x8xf32>
    %40 = vector.shape_cast %39 : vector<1x8xf32> to vector<1x1x8xf32>
    %41 = vector.broadcast %40 : vector<1x1x8xf32> to vector<4x8x8xf32>
    %42 = arith.addf %38, %41 : vector<4x8x8xf32>
    %cst_21 = arith.constant dense<0xFF800000> : vector<4x8xf32>
    %43 = vector.multi_reduction <maximumf>, %42, %cst_21 [2] : vector<4x8x8xf32> to vector<4x8xf32>
    %44 = vector.shape_cast %43 : vector<4x8xf32> to vector<4x8x1xf32>
    %45 = vector.broadcast %44 : vector<4x8x1xf32> to vector<4x8x8xf32>
    %46 = arith.subf %42, %45 : vector<4x8x8xf32>
    %47 = math.exp %46 : vector<4x8x8xf32>
    %cst_22 = arith.constant dense<0.000000e+00> : vector<4x8xf32>
    %48 = vector.multi_reduction <add>, %47, %cst_22 [2] : vector<4x8x8xf32> to vector<4x8xf32>
    %49 = vector.shape_cast %48 : vector<4x8xf32> to vector<4x8x1xf32>
    %50 = arith.truncf %47 : vector<4x8x8xf32> to vector<4x8x8xbf16>
    "tpu.trace_start"() <{level = 10 : i32, message = "hst,hdt->hsd"}> : () -> ()
    %cst_23 = arith.constant dense<0.000000e+00> : vector<4x8x8xf32>
    %51 = tpu.matmul %50, %36, %cst_23 {dimension_numbers = #tpu.dot_dimension_numbers<[2], [2], [1], [1], [0, 0, 0, 1, 1, 1], [0], [0]>} : vector<4x8x8xbf16>, vector<4x8x8xbf16>, vector<4x8x8xf32> -> vector<4x8x8xf32>
    "tpu.trace_stop"() : () -> ()
    %52 = tpu.reciprocal %49 {approx = true} : vector<4x8x1xf32> -> vector<4x8x1xf32>
    %53 = vector.broadcast %52 : vector<4x8x1xf32> to vector<4x8x8xf32>
    %54 = arith.mulf %51, %53 : vector<4x8x8xf32>
    %55 = arith.truncf %54 : vector<4x8x8xf32> to vector<4x8x8xbf16>
    "tpu.trace_start"() <{level = 10 : i32, message = "hsd,hde->hse"}> : () -> ()
    %cst_24 = arith.constant dense<0.000000e+00> : vector<4x8x128xf32>
    %56 = tpu.matmul %55, %30, %cst_24 {dimension_numbers = #tpu.dot_dimension_numbers<[2], [1], [1], [2], [0, 0, 0, 1, 1, 2], [0], [0]>} : vector<4x8x8xbf16>, vector<4x8x128xbf16>, vector<4x8x128xf32> -> vector<4x8x128xf32>
    "tpu.trace_stop"() : () -> ()
    %57 = vector.extract_strided_slice %3 {offsets = [0, 0], sizes = [8, 128], strides = [1, 1]} : vector<16x128xf32> to vector<8x128xf32>
    %cst_25 = arith.constant dense<0.000000e+00> : vector<8x128xf32>
    %58 = vector.multi_reduction <add>, %56, %cst_25 [0] : vector<4x8x128xf32> to vector<8x128xf32>
    %59 = arith.addf %57, %58 : vector<8x128xf32>
    %c0_26 = arith.constant 0 : index
    %c0_27 = arith.constant 0 : index
    %60 = vector.load %arg12[%c0_26, %c0_27] : memref<16x128xf32, #tpu.memory_space<vmem>>, vector<8x128xf32>
    tpu.vector_store %arg12[%c0_26, %c0_27], %59 {strides = array<i32>} : memref<16x128xf32, #tpu.memory_space<vmem>>, vector<8x128xf32>,
    %61 = vector.extract_strided_slice %24 {offsets = [0, 8, 0], sizes = [4, 8, 8], strides = [1, 1, 1]} : vector<4x16x8xf32> to vector<4x8x8xf32>
    %62 = arith.truncf %61 : vector<4x8x8xf32> to vector<4x8x8xbf16>
    %63 = vector.extract_strided_slice %25 {offsets = [0, 0, 8], sizes = [4, 8, 8], strides = [1, 1, 1]} : vector<4x8x16xf32> to vector<4x8x8xf32>
    %64 = arith.truncf %63 : vector<4x8x8xf32> to vector<4x8x8xbf16>
    %65 = vector.extract_strided_slice %26 {offsets = [0, 0, 8], sizes = [4, 8, 8], strides = [1, 1, 1]} : vector<4x8x16xf32> to vector<4x8x8xf32>
    %66 = arith.truncf %65 : vector<4x8x8xf32> to vector<4x8x8xbf16>
    "tpu.trace_start"() <{level = 10 : i32, message = "hsd,hdt->hst"}> : () -> ()
    %cst_28 = arith.constant dense<0.000000e+00> : vector<4x8x8xf32>
    %67 = tpu.matmul %62, %64, %cst_28 {dimension_numbers = #tpu.dot_dimension_numbers<[2], [1], [1], [2], [0, 0, 0, 1, 1, 2], [0], [0]>} : vector<4x8x8xbf16>, vector<4x8x8xbf16>, vector<4x8x8xf32> -> vector<4x8x8xf32>
    "tpu.trace_stop"() : () -> ()
    %68 = arith.addf %67, %27 : vector<4x8x8xf32>
    %69 = vector.extract_strided_slice %28 {offsets = [1, 0], sizes = [1, 8], strides = [1, 1]} : vector<2x8xf32> to vector<1x8xf32>
    %70 = vector.shape_cast %69 : vector<1x8xf32> to vector<1x1x8xf32>
    %71 = vector.broadcast %70 : vector<1x1x8xf32> to vector<4x8x8xf32>
    %72 = arith.addf %68, %71 : vector<4x8x8xf32>
    %cst_29 = arith.constant dense<0xFF800000> : vector<4x8xf32>
    %73 = vector.multi_reduction <maximumf>, %72, %cst_29 [2] : vector<4x8x8xf32> to vector<4x8xf32>
    %74 = vector.shape_cast %73 : vector<4x8xf32> to vector<4x8x1xf32>
    %75 = vector.broadcast %74 : vector<4x8x1xf32> to vector<4x8x8xf32>
    %76 = arith.subf %72, %75 : vector<4x8x8xf32>
    %77 = math.exp %76 : vector<4x8x8xf32>
    %cst_30 = arith.constant dense<0.000000e+00> : vector<4x8xf32>
    %78 = vector.multi_reduction <add>, %77, %cst_30 [2] : vector<4x8x8xf32> to vector<4x8xf32>
    %79 = vector.shape_cast %78 : vector<4x8xf32> to vector<4x8x1xf32>
    %80 = arith.truncf %77 : vector<4x8x8xf32> to vector<4x8x8xbf16>
    "tpu.trace_start"() <{level = 10 : i32, message = "hst,hdt->hsd"}> : () -> ()
    %cst_31 = arith.constant dense<0.000000e+00> : vector<4x8x8xf32>
    %81 = tpu.matmul %80, %66, %cst_31 {dimension_numbers = #tpu.dot_dimension_numbers<[2], [2], [1], [1], [0, 0, 0, 1, 1, 1], [0], [0]>} : vector<4x8x8xbf16>, vector<4x8x8xbf16>, vector<4x8x8xf32> -> vector<4x8x8xf32>
    "tpu.trace_stop"() : () -> ()
    %82 = tpu.reciprocal %79 {approx = true} : vector<4x8x1xf32> -> vector<4x8x1xf32>
    %83 = vector.broadcast %82 : vector<4x8x1xf32> to vector<4x8x8xf32>
    %84 = arith.mulf %81, %83 : vector<4x8x8xf32>
    %85 = arith.truncf %84 : vector<4x8x8xf32> to vector<4x8x8xbf16>
    "tpu.trace_start"() <{level = 10 : i32, message = "hsd,hde->hse"}> : () -> ()
    %cst_32 = arith.constant dense<0.000000e+00> : vector<4x8x128xf32>
    %86 = tpu.matmul %85, %30, %cst_32 {dimension_numbers = #tpu.dot_dimension_numbers<[2], [1], [1], [2], [0, 0, 0, 1, 1, 2], [0], [0]>} : vector<4x8x8xbf16>, vector<4x8x128xbf16>, vector<4x8x128xf32> -> vector<4x8x128xf32>
    "tpu.trace_stop"() : () -> ()
    %87 = vector.extract_strided_slice %3 {offsets = [8, 0], sizes = [8, 128], strides = [1, 1]} : vector<16x128xf32> to vector<8x128xf32>
    %cst_33 = arith.constant dense<0.000000e+00> : vector<8x128xf32>
    %88 = vector.multi_reduction <add>, %86, %cst_33 [0] : vector<4x8x128xf32> to vector<8x128xf32>
    %89 = arith.addf %87, %88 : vector<8x128xf32>
    %c8 = arith.constant 8 : index
    %c0_34 = arith.constant 0 : index
    %90 = vector.load %arg12[%c8, %c0_34] : memref<16x128xf32, #tpu.memory_space<vmem>>, vector<8x128xf32>
    tpu.vector_store %arg12[%c8, %c0_34], %89 {strides = array<i32>} : memref<16x128xf32, #tpu.memory_space<vmem>>, vector<8x128xf32>,
    %c0_35 = arith.constant 0 : index
    %c0_36 = arith.constant 0 : index
    %91 = vector.load %arg12[%c0_35, %c0_36] : memref<16x128xf32, #tpu.memory_space<vmem>>, vector<16x128xf32>
    %c0_37 = arith.constant 0 : index
    %c0_38 = arith.constant 0 : index
    %c0_39 = arith.constant 0 : index
    %92 = vector.load %arg7[%c0_37, %c0_38, %c0_39] : memref<1x1x128xf32, #tpu.memory_space<vmem>>, vector<1x1x128xf32>
    %93 = vector.shape_cast %92 : vector<1x1x128xf32> to vector<1x128xf32>
    %94 = arith.mulf %91, %91 : vector<16x128xf32>
    %cst_40 = arith.constant dense<0.000000e+00> : vector<16xf32>
    %95 = vector.multi_reduction <add>, %94, %cst_40 [1] : vector<16x128xf32> to vector<16xf32>
    %96 = vector.shape_cast %95 : vector<16xf32> to vector<16x1xf32>
    %cst_41 = arith.constant 3.125000e-02 : f32
    %97 = vector.broadcast %cst_41 : f32 to vector<16x1xf32>
    %98 = arith.mulf %96, %97 : vector<16x1xf32>
    %cst_42 = arith.constant 9.99999997E-7 : f32
    %99 = vector.broadcast %cst_42 : f32 to vector<16x1xf32>
    %100 = arith.addf %98, %99 : vector<16x1xf32>
    %101 = math.rsqrt %100 : vector<16x1xf32>
    %102 = vector.broadcast %101 : vector<16x1xf32> to vector<16x128xf32>
    %103 = arith.mulf %91, %102 : vector<16x128xf32>
    %104 = vector.broadcast %93 : vector<1x128xf32> to vector<16x128xf32>
    %105 = arith.mulf %103, %104 : vector<16x128xf32>
    %106 = arith.truncf %105 : vector<16x128xf32> to vector<16x128xbf16>
    %c0_43 = arith.constant 0 : index
    %c0_44 = arith.constant 0 : index
    %c0_45 = arith.constant 0 : index
    %107 = vector.load %arg8[%c0_43, %c0_44, %c0_45] : memref<1x128x128xbf16, #tpu.memory_space<vmem>>, vector<1x128x128xbf16>
    %108 = vector.shape_cast %107 : vector<1x128x128xbf16> to vector<128x128xbf16>
    %cst_46 = arith.constant dense<0.000000e+00> : vector<16x128xf32>
    %109 = tpu.matmul %106, %108, %cst_46 {dimension_numbers = #tpu.dot_dimension_numbers<[1], [0], [0], [1], [0, 0, 1, 1], [], []>} : vector<16x128xbf16>, vector<128x128xbf16>, vector<16x128xf32> -> vector<16x128xf32>
    %cst_47 = arith.constant 0.000000e+00 : f32
    %110 = vector.broadcast %cst_47 : f32 to vector<16x128xf32>
    %111 = arith.maximumf %109, %110 : vector<16x128xf32>
    %112 = arith.truncf %111 : vector<16x128xf32> to vector<16x128xbf16>
    %c0_48 = arith.constant 0 : index
    %c0_49 = arith.constant 0 : index
    %c0_50 = arith.constant 0 : index
    %113 = vector.load %arg9[%c0_48, %c0_49, %c0_50] : memref<1x128x128xbf16, #tpu.memory_space<vmem>>, vector<1x128x128xbf16>
    %114 = vector.shape_cast %113 : vector<1x128x128xbf16> to vector<128x128xbf16>
    %cst_51 = arith.constant dense<0.000000e+00> : vector<16x128xf32>
    %115 = tpu.matmul %112, %114, %cst_51 {dimension_numbers = #tpu.dot_dimension_numbers<[1], [0], [0], [1], [0, 0, 1, 1], [], []>} : vector<16x128xbf16>, vector<128x128xbf16>, vector<16x128xf32> -> vector<16x128xf32>
    %116 = arith.addf %91, %115 : vector<16x128xf32>
    %c0_52 = arith.constant 0 : index
    %c0_53 = arith.constant 0 : index
    %117 = vector.load %arg12[%c0_52, %c0_53] : memref<16x128xf32, #tpu.memory_space<vmem>>, vector<16x128xf32>
    tpu.vector_store %arg12[%c0_52, %c0_53], %116 {strides = array<i32>} : memref<16x128xf32, #tpu.memory_space<vmem>>, vector<16x128xf32>,
    %c1_i32 = arith.constant 1 : i32
    %118 = arith.cmpi eq, %arg0, %c1_i32 : i32
    %119 = arith.extui %118 : i1 to i32
    %c0_i32_54 = arith.constant 0 : i32
    %120 = arith.cmpi ne, %119, %c0_i32_54 : i32
    scf.if %120 {
      %c0_55 = arith.constant 0 : index
      %c0_56 = arith.constant 0 : index
      %121 = vector.load %arg12[%c0_55, %c0_56] : memref<16x128xf32, #tpu.memory_space<vmem>>, vector<16x128xf32>
      %c0_57 = arith.constant 0 : index
      %c0_58 = arith.constant 0 : index
      %122 = vector.load %arg10[%c0_57, %c0_58] : memref<1x128xf32, #tpu.memory_space<vmem>>, vector<1x128xf32>
      %123 = arith.mulf %121, %121 : vector<16x128xf32>
      %cst_59 = arith.constant dense<0.000000e+00> : vector<16xf32>
      %124 = vector.multi_reduction <add>, %123, %cst_59 [1] : vector<16x128xf32> to vector<16xf32>
      %125 = vector.shape_cast %124 : vector<16xf32> to vector<16x1xf32>
      %cst_60 = arith.constant 3.125000e-02 : f32
      %126 = vector.broadcast %cst_60 : f32 to vector<16x1xf32>
      %127 = arith.mulf %125, %126 : vector<16x1xf32>
      %cst_61 = arith.constant 9.99999997E-7 : f32
      %128 = vector.broadcast %cst_61 : f32 to vector<16x1xf32>
      %129 = arith.addf %127, %128 : vector<16x1xf32>
      %130 = math.rsqrt %129 : vector<16x1xf32>
      %131 = vector.broadcast %130 : vector<16x1xf32> to vector<16x128xf32>
      %132 = arith.mulf %121, %131 : vector<16x128xf32>
      %133 = vector.broadcast %122 : vector<1x128xf32> to vector<16x128xf32>
      %134 = arith.mulf %132, %133 : vector<16x128xf32>
      %c0_62 = arith.constant 0 : index
      %c0_63 = arith.constant 0 : index
      %135 = vector.load %arg11[%c0_62, %c0_63] : memref<16x128xf32, #tpu.memory_space<vmem>>, vector<16x128xf32>
      tpu.vector_store %arg11[%c0_62, %c0_63], %134 {strides = array<i32>} : memref<16x128xf32, #tpu.memory_space<vmem>>, vector<16x128xf32>,
    } else {
    }
    return
  }
  func.func @transform_0(%arg0: i32) -> (i32, i32) {
    %c0_i32 = arith.constant 0 : i32
    %c0_i32_0 = arith.constant 0 : i32
    %c0_i32_1 = arith.constant 0 : i32
    return %c0_i32, %c0_i32_0 : i32, i32
  }
  func.func @transform_1(%arg0: i32) -> (i32, i32, i32) {
    %c0_i32 = arith.constant 0 : i32
    %c0_i32_0 = arith.constant 0 : i32
    %c0_i32_1 = arith.constant 0 : i32
    %c0_i32_2 = arith.constant 0 : i32
    return %c0_i32, %c0_i32_0, %c0_i32_1 : i32, i32, i32
  }
  func.func @transform_2(%arg0: i32) -> (i32, i32) {
    %c0_i32 = arith.constant 0 : i32
    %c0_i32_0 = arith.constant 0 : i32
    %c0_i32_1 = arith.constant 0 : i32
    return %c0_i32, %c0_i32_0 : i32, i32
  }
  func.func @transform_3(%arg0: i32) -> (i32, i32, i32) {
    %c0_i32 = arith.constant 0 : i32
    %c0_i32_0 = arith.constant 0 : i32
    %c0_i32_1 = arith.constant 0 : i32
    return %arg0, %c0_i32, %c0_i32_0 : i32, i32, i32
  }
  func.func @transform_4(%arg0: i32) -> (i32, i32, i32) {
    %c0_i32 = arith.constant 0 : i32
    %c0_i32_0 = arith.constant 0 : i32
    %c0_i32_1 = arith.constant 0 : i32
    return %arg0, %c0_i32, %c0_i32_0 : i32, i32, i32
  }
  func.func @transform_5(%arg0: i32) -> (i32, i32, i32, i32) {
    %c0_i32 = arith.constant 0 : i32
    %c0_i32_0 = arith.constant 0 : i32
    %c0_i32_1 = arith.constant 0 : i32
    %c0_i32_2 = arith.constant 0 : i32
    return %arg0, %c0_i32, %c0_i32_0, %c0_i32_1 : i32, i32, i32, i32
  }
  func.func @transform_6(%arg0: i32) -> (i32, i32, i32) {
    %c0_i32 = arith.constant 0 : i32
    %c0_i32_0 = arith.constant 0 : i32
    %c0_i32_1 = arith.constant 0 : i32
    return %arg0, %c0_i32, %c0_i32_0 : i32, i32, i32
  }
  func.func @transform_7(%arg0: i32) -> (i32, i32, i32) {
    %c0_i32 = arith.constant 0 : i32
    %c0_i32_0 = arith.constant 0 : i32
    %c0_i32_1 = arith.constant 0 : i32
    return %arg0, %c0_i32, %c0_i32_0 : i32, i32, i32
  }
  func.func @transform_8(%arg0: i32) -> (i32, i32, i32) {
    %c0_i32 = arith.constant 0 : i32
    %c0_i32_0 = arith.constant 0 : i32
    %c0_i32_1 = arith.constant 0 : i32
    return %arg0, %c0_i32, %c0_i32_0 : i32, i32, i32
  }
  func.func @transform_9(%arg0: i32) -> (i32, i32) {
    %c0_i32 = arith.constant 0 : i32
    %c0_i32_0 = arith.constant 0 : i32
    %c0_i32_1 = arith.constant 0 : i32
    return %c0_i32, %c0_i32_0 : i32, i32
  }
  func.func @transform_10(%arg0: i32) -> (i32, i32) {
    %c0_i32 = arith.constant 0 : i32
    %c0_i32_0 = arith.constant 0 : i32
    %c0_i32_1 = arith.constant 0 : i32
    return %c0_i32, %c0_i32_0 : i32, i32
  }
}

</mosaic_0001>

<llo_original>
// kernel: text_clip_forward.1
$region0: #{text_clip_forward.1}
  #allocation0 [shape = 'u32[]', space=smem, size = 0x4, offset = 0x4, fixed_abs, tag = 'smem constant byte address 0x4 - core index']
  #allocation1 [shape = 'u32[144,128]{1,0:T(1,128)}', space=vmem, size = 0x12000, scoped, tag = 'internal scratch']
  #allocation2 [shape = 'f32[16,128]{1,0:T(8,128)}', space=vmem, size = 0x2000, scoped, tag = 'scratch operand']
  %s0 = inlined_call_operand.vmem [shape: f32[16,128], index: 0, kind: input, shape index: {}]
  %s1 = inlined_call_operand.vmem [shape: f32[4,8,8], index: 1, kind: input, shape index: {}]
  %s2 = inlined_call_operand.vmem [shape: f32[2,8], index: 2, kind: input, shape index: {}]
  %s3 = inlined_call_operand.vmem [shape: f32[2,1,128], index: 3, kind: input, shape index: {}]
  %s4 = inlined_call_operand.vmem [shape: bf16[2,96,128], index: 4, kind: input, shape index: {}]
  %s5 = inlined_call_operand.vmem [shape: bf16[2,4,8,128], index: 5, kind: input, shape index: {}]
  %s6 = inlined_call_operand.vmem [shape: f32[2,1,128], index: 6, kind: input, shape index: {}]
  %s7 = inlined_call_operand.vmem [shape: bf16[2,128,128], index: 7, kind: input, shape index: {}]
  %s8 = inlined_call_operand.vmem [shape: bf16[2,128,128], index: 8, kind: input, shape index: {}]
  %s9 = inlined_call_operand.vmem [shape: f32[1,128], index: 9, kind: input, shape index: {}]
  %s10 = inlined_call_operand.vmem [shape: f32[16,128], index: 10, kind: output, shape index: {}]
  %s11 = sld [smem:[#allocation0]]
  $region81: #{text_clip_forward.1} parent=0
    _
  %s13 = ssub.s32 1, %s11
  %s14 = scalar_select 0, %s13, %s11
  loop: start=0, step=1, limit=4
  $region2: #{text_clip_forward.1} parent=0 // loop_pre_header
    _
  $region3: #{text_clip_forward.1} parent=0 // loop_header
    %s16 = sphi 0, %s20
    %p17 = scmp.ge.s32.totalorder %s16, 4
    %s24 = sphi 0, %s24
    %s26 = sphi 0, %s24
    %s27 = sphi 0, %s26
    %s41 = sphi 0, %s27
    %s45 = sphi 0, %s45
    %s47 = sphi 0, %s45
    %s48 = sphi 0, %s47
    %s62 = sphi 0, %s48
    %s66 = sphi 0, %s66
    %s68 = sphi 0, %s66
    %s69 = sphi 0, %s68
    %s83 = sphi 0, %s69
    %s89 = sphi 0, %s91
    %s92 = sphi 0, %s89
    %s93 = sphi 0, %s92
    %s109 = sphi 0, %s93
    %s115 = sphi 0, %s117
    %s118 = sphi 0, %s115
    %s119 = sphi 0, %s118
    %s135 = sphi 0, %s119
    %s141 = sphi 0, %s143
    %s144 = sphi 0, %s141
    %s145 = sphi 0, %s144
    %s161 = sphi 0, %s145
    %s167 = sphi 0, %s169
    %s170 = sphi 0, %s167
    %s171 = sphi 0, %s170
    %s187 = sphi 0, %s171
    %s193 = sphi 0, %s195
    %s196 = sphi 0, %s193
    %s197 = sphi 0, %s196
    %s213 = sphi 0, %s197
    %s219 = sphi 0, %s221
    %s222 = sphi 0, %s219
    %s223 = sphi 0, %s222
    %s239 = sphi 0, %s223
    %s243 = sphi 0, %s243
    %s245 = sphi 0, %s243
    %s246 = sphi 0, %s245
    %s260 = sphi 0, %s246
    %s264 = sphi 0, %s264
    %s266 = sphi 0, %s264
    %s267 = sphi 0, %s266
    %s281 = sphi 0, %s267
  $region4: #{text_clip_forward.1} parent=0 // loop_header_branch
    %19 = sbr.rel (%p17) target = $region8
  $region5: #{text_clip_forward.1} parent=0 // loop_body
    %s21 = ssub.s32 %s16, 1
    %s22 = ssub.s32 %s16, 2
    %s23 = sadd.s32 %s16, 1
    %s25 = sadd.s32 %s24, 1
    %p28 = scmp.eq.s32.totalorder %s16, 1
    %p29 = scmp.ne.s32.totalorder %s24, %s26
    %p30 = scmp.eq.s32.totalorder %s16, 0
    %p31 = por %p29, %p30
    %p32 = scmp.ne.s32.totalorder %s24, %s26
    %p33 = scmp.eq.s32.totalorder %s21, 1
    %p34 = por %p32, %p33
    %p35 = scmp.ne.s32.totalorder %s26, %s27
    %p36 = scmp.eq.s32.totalorder %s21, 0
    %p37 = por %p35, %p36
    %p38 = scmp.ne.s32.totalorder %s26, %s27
    %p39 = scmp.eq.s32.totalorder %s22, 1
    %p40 = por %p38, %p39
    %p42 = scmp.ne.s32.totalorder %s27, %s41
    %p43 = scmp.eq.s32.totalorder %s22, 0
    %p44 = por %p42, %p43
    %s46 = sadd.s32 %s45, 1
    %p49 = scmp.eq.s32.totalorder %s16, 1
    %p50 = scmp.ne.s32.totalorder %s45, %s47
    %p51 = scmp.eq.s32.totalorder %s16, 0
    %p52 = por %p50, %p51
    %p53 = scmp.ne.s32.totalorder %s45, %s47
    %p54 = scmp.eq.s32.totalorder %s21, 1
    %p55 = por %p53, %p54
    %p56 = scmp.ne.s32.totalorder %s47, %s48
    %p57 = scmp.eq.s32.totalorder %s21, 0
    %p58 = por %p56, %p57
    %p59 = scmp.ne.s32.totalorder %s47, %s48
    %p60 = scmp.eq.s32.totalorder %s22, 1
    %p61 = por %p59, %p60
    %p63 = scmp.ne.s32.totalorder %s48, %s62
    %p64 = scmp.eq.s32.totalorder %s22, 0
    %p65 = por %p63, %p64
    %s67 = sadd.s32 %s66, 1
    %p70 = scmp.eq.s32.totalorder %s16, 1
    %p71 = scmp.ne.s32.totalorder %s66, %s68
    %p72 = scmp.eq.s32.totalorder %s16, 0
    %p73 = por %p71, %p72
    %p74 = scmp.ne.s32.totalorder %s66, %s68
    %p75 = scmp.eq.s32.totalorder %s21, 1
    %p76 = por %p74, %p75
    %p77 = scmp.ne.s32.totalorder %s68, %s69
    %p78 = scmp.eq.s32.totalorder %s21, 0
    %p79 = por %p77, %p78
    %p80 = scmp.ne.s32.totalorder %s68, %s69
    %p81 = scmp.eq.s32.totalorder %s22, 1
    %p82 = por %p80, %p81
    %p84 = scmp.ne.s32.totalorder %s69, %s83
    %p85 = scmp.eq.s32.totalorder %s22, 0
    %p86 = por %p84, %p85
    %s87 = ssub.s32 %s16, %s23
    %p88 = scmp.eq.s32.totalorder %s87, 0
    %s90 = sadd.s32 %s89, 1
    %s91 = scalar_select %p88, %s89, %s90
    %p94 = pneg %p88
    %p95 = scmp.eq.s32.totalorder %s16, 1
    %p96 = por %p94, %p95
    %p97 = scmp.ne.s32.totalorder %s89, %s92
    %p98 = scmp.eq.s32.totalorder %s16, 0
    %p99 = por %p97, %p98
    %p100 = scmp.ne.s32.totalorder %s89, %s92
    %p101 = scmp.eq.s32.totalorder %s21, 1
    %p102 = por %p100, %p101
    %p103 = scmp.ne.s32.totalorder %s92, %s93
    %p104 = scmp.eq.s32.totalorder %s21, 0
    %p105 = por %p103, %p104
    %p106 = scmp.ne.s32.totalorder %s92, %s93
    %p107 = scmp.eq.s32.totalorder %s22, 1
    %p108 = por %p106, %p107
    %p110 = scmp.ne.s32.totalorder %s93, %s109
    %p111 = scmp.eq.s32.totalorder %s22, 0
    %p112 = por %p110, %p111
    %s113 = ssub.s32 %s16, %s23
    %p114 = scmp.eq.s32.totalorder %s113, 0
    %s116 = sadd.s32 %s115, 1
    %s117 = scalar_select %p114, %s115, %s116
    %p120 = pneg %p114
    %p121 = scmp.eq.s32.totalorder %s16, 1
    %p122 = por %p120, %p121
    %p123 = scmp.ne.s32.totalorder %s115, %s118
    %p124 = scmp.eq.s32.totalorder %s16, 0
    %p125 = por %p123, %p124
    %p126 = scmp.ne.s32.totalorder %s115, %s118
    %p127 = scmp.eq.s32.totalorder %s21, 1
    %p128 = por %p126, %p127
    %p129 = scmp.ne.s32.totalorder %s118, %s119
    %p130 = scmp.eq.s32.totalorder %s21, 0
    %p131 = por %p129, %p130
    %p132 = scmp.ne.s32.totalorder %s118, %s119
    %p133 = scmp.eq.s32.totalorder %s22, 1
    %p134 = por %p132, %p133
    %p136 = scmp.ne.s32.totalorder %s119, %s135
    %p137 = scmp.eq.s32.totalorder %s22, 0
    %p138 = por %p136, %p137
    %s139 = ssub.s32 %s16, %s23
    %p140 = scmp.eq.s32.totalorder %s139, 0
    %s142 = sadd.s32 %s141, 1
    %s143 = scalar_select %p140, %s141, %s142
    %p146 = pneg %p140
    %p147 = scmp.eq.s32.totalorder %s16, 1
    %p148 = por %p146, %p147
    %p149 = scmp.ne.s32.totalorder %s141, %s144
    %p150 = scmp.eq.s32.totalorder %s16, 0
    %p151 = por %p149, %p150
    %p152 = scmp.ne.s32.totalorder %s141, %s144
    %p153 = scmp.eq.s32.totalorder %s21, 1
    %p154 = por %p152, %p153
    %p155 = scmp.ne.s32.totalorder %s144, %s145
    %p156 = scmp.eq.s32.totalorder %s21, 0
    %p157 = por %p155, %p156
    %p158 = scmp.ne.s32.totalorder %s144, %s145
    %p159 = scmp.eq.s32.totalorder %s22, 1
    %p160 = por %p158, %p159
    %p162 = scmp.ne.s32.totalorder %s145, %s161
    %p163 = scmp.eq.s32.totalorder %s22, 0
    %p164 = por %p162, %p163
    %s165 = ssub.s32 %s16, %s23
    %p166 = scmp.eq.s32.totalorder %s165, 0
    %s168 = sadd.s32 %s167, 1
    %s169 = scalar_select %p166, %s167, %s168
    %p172 = pneg %p166
    %p173 = scmp.eq.s32.totalorder %s16, 1
    %p174 = por %p172, %p173
    %p175 = scmp.ne.s32.totalorder %s167, %s170
    %p176 = scmp.eq.s32.totalorder %s16, 0
    %p177 = por %p175, %p176
    %p178 = scmp.ne.s32.totalorder %s167, %s170
    %p179 = scmp.eq.s32.totalorder %s21, 1
    %p180 = por %p178, %p179
    %p181 = scmp.ne.s32.totalorder %s170, %s171
    %p182 = scmp.eq.s32.totalorder %s21, 0
    %p183 = por %p181, %p182
    %p184 = scmp.ne.s32.totalorder %s170, %s171
    %p185 = scmp.eq.s32.totalorder %s22, 1
    %p186 = por %p184, %p185
    %p188 = scmp.ne.s32.totalorder %s171, %s187
    %p189 = scmp.eq.s32.totalorder %s22, 0
    %p190 = por %p188, %p189
    %s191 = ssub.s32 %s16, %s23
    %p192 = scmp.eq.s32.totalorder %s191, 0
    %s194 = sadd.s32 %s193, 1
    %s195 = scalar_select %p192, %s193, %s194
    %p198 = pneg %p192
    %p199 = scmp.eq.s32.totalorder %s16, 1
    %p200 = por %p198, %p199
    %p201 = scmp.ne.s32.totalorder %s193, %s196
    %p202 = scmp.eq.s32.totalorder %s16, 0
    %p203 = por %p201, %p202
    %p204 = scmp.ne.s32.totalorder %s193, %s196
    %p205 = scmp.eq.s32.totalorder %s21, 1
    %p206 = por %p204, %p205
    %p207 = scmp.ne.s32.totalorder %s196, %s197
    %p208 = scmp.eq.s32.totalorder %s21, 0
    %p209 = por %p207, %p208
    %p210 = scmp.ne.s32.totalorder %s196, %s197
    %p211 = scmp.eq.s32.totalorder %s22, 1
    %p212 = por %p210, %p211
    %p214 = scmp.ne.s32.totalorder %s197, %s213
    %p215 = scmp.eq.s32.totalorder %s22, 0
    %p216 = por %p214, %p215
    %s217 = ssub.s32 %s16, %s23
    %p218 = scmp.eq.s32.totalorder %s217, 0
    %s220 = sadd.s32 %s219, 1
    %s221 = scalar_select %p218, %s219, %s220
    %p224 = pneg %p218
    %p225 = scmp.eq.s32.totalorder %s16, 1
    %p226 = por %p224, %p225
    %p227 = scmp.ne.s32.totalorder %s219, %s222
    %p228 = scmp.eq.s32.totalorder %s16, 0
    %p229 = por %p227, %p228
    %p230 = scmp.ne.s32.totalorder %s219, %s222
    %p231 = scmp.eq.s32.totalorder %s21, 1
    %p232 = por %p230, %p231
    %p233 = scmp.ne.s32.totalorder %s222, %s223
    %p234 = scmp.eq.s32.totalorder %s21, 0
    %p235 = por %p233, %p234
    %p236 = scmp.ne.s32.totalorder %s222, %s223
    %p237 = scmp.eq.s32.totalorder %s22, 1
    %p238 = por %p236, %p237
    %p240 = scmp.ne.s32.totalorder %s223, %s239
    %p241 = scmp.eq.s32.totalorder %s22, 0
    %p242 = por %p240, %p241
    %s244 = sadd.s32 %s243, 1
    %p247 = scmp.eq.s32.totalorder %s16, 1
    %p248 = scmp.ne.s32.totalorder %s243, %s245
    %p249 = scmp.eq.s32.totalorder %s16, 0
    %p250 = por %p248, %p249
    %p251 = scmp.ne.s32.totalorder %s243, %s245
    %p252 = scmp.eq.s32.totalorder %s21, 1
    %p253 = por %p251, %p252
    %p254 = scmp.ne.s32.totalorder %s245, %s246
    %p255 = scmp.eq.s32.totalorder %s21, 0
    %p256 = por %p254, %p255
    %p257 = scmp.ne.s32.totalorder %s245, %s246
    %p258 = scmp.eq.s32.totalorder %s22, 1
    %p259 = por %p257, %p258
    %p261 = scmp.ne.s32.totalorder %s246, %s260
    %p262 = scmp.eq.s32.totalorder %s22, 0
    %p263 = por %p261, %p262
    %s265 = sadd.s32 %s264, 1
    %p268 = scmp.eq.s32.totalorder %s16, 1
    %p269 = scmp.ne.s32.totalorder %s264, %s266
    %p270 = scmp.eq.s32.totalorder %s16, 0
    %p271 = por %p269, %p270
    %p272 = scmp.ne.s32.totalorder %s264, %s266
    %p273 = scmp.eq.s32.totalorder %s21, 1
    %p274 = por %p272, %p273
    %p275 = scmp.ne.s32.totalorder %s266, %s267
    %p276 = scmp.eq.s32.totalorder %s21, 0
    %p277 = por %p275, %p276
    %p278 = scmp.ne.s32.totalorder %s266, %s267
    %p279 = scmp.eq.s32.totalorder %s22, 1
    %p280 = por %p278, %p279
    %p282 = scmp.ne.s32.totalorder %s267, %s281
    %p283 = scmp.eq.s32.totalorder %s22, 0
    %p284 = por %p282, %p283
    %p285 = scmp.le.s32.totalorder 1, %s16
    %p286 = scmp.lt.s32.totalorder %s16, 3
    %p287 = pnand %p285, %p286
    %p288 = pneg %p287
    // Predicated region
    $region9: #{text_clip_forward.1} parent=5 // pred_check
      _
    $region10: #{text_clip_forward.1} parent=5 // pred_check_branch
      %290 = sbr.rel (%p287) target = $region12
    $region11: #{text_clip_forward.1} parent=5 // pred_region
      %s291 = ssub.s32 %s16, 1
      // Predicated region
      $region13: #{text_clip_forward.1} parent=11 // pred_check
        %p292 = pneg %p37
      $region14: #{text_clip_forward.1} parent=11 // pred_check_branch
        %294 = sbr.rel (%p292) target = $region16
      $region15: #{text_clip_forward.1} parent=11 // pred_region
        _
      $region16: #{text_clip_forward.1} parent=11 // pred_fallthru
        _
      // Predicated region
      $region17: #{text_clip_forward.1} parent=11 // pred_check
        %p295 = pneg %p58
      $region18: #{text_clip_forward.1} parent=11 // pred_check_branch
        %297 = sbr.rel (%p295) target = $region20
      $region19: #{text_clip_forward.1} parent=11 // pred_region
        _
      $region20: #{text_clip_forward.1} parent=11 // pred_fallthru
        _
      // Predicated region
      $region21: #{text_clip_forward.1} parent=11 // pred_check
        %p298 = pneg %p79
      $region22: #{text_clip_forward.1} parent=11 // pred_check_branch
        %300 = sbr.rel (%p298) target = $region24
      $region23: #{text_clip_forward.1} parent=11 // pred_region
        _
      $region24: #{text_clip_forward.1} parent=11 // pred_fallthru
        _
      // Predicated region
      $region25: #{text_clip_forward.1} parent=11 // pred_check
        %p301 = pneg %p256
      $region26: #{text_clip_forward.1} parent=11 // pred_check_branch
        %303 = sbr.rel (%p301) target = $region28
      $region27: #{text_clip_forward.1} parent=11 // pred_region
        _
      $region28: #{text_clip_forward.1} parent=11 // pred_fallthru
        _
    $region12: #{text_clip_forward.1} parent=5 // pred_fallthru
      _
    %p304 = scmp.lt.s32.totalorder %s16, 2
    // Predicated region
    $region29: #{text_clip_forward.1} parent=5 // pred_check
      %p305 = pneg %p304
    $region30: #{text_clip_forward.1} parent=5 // pred_check_branch
      %307 = sbr.rel (%p305) target = $region32
    $region31: #{text_clip_forward.1} parent=5 // pred_region
      // Predicated region
      $region33: #{text_clip_forward.1} parent=31 // pred_check
        %p308 = pneg %p99
      $region34: #{text_clip_forward.1} parent=31 // pred_check_branch
        %310 = sbr.rel (%p308) target = $region36
      $region35: #{text_clip_forward.1} parent=31 // pred_region
        %p311 = scmp.lt.s32.totalorder %s16, 1
        %s312 = scalar_select %p311, %s16, 1
        %s313 = scalar_lea.vmem %s3, %s312
      $region36: #{text_clip_forward.1} parent=31 // pred_fallthru
        _
      // Predicated region
      $region37: #{text_clip_forward.1} parent=31 // pred_check
        %p314 = pneg %p125
      $region38: #{text_clip_forward.1} parent=31 // pred_check_branch
        %316 = sbr.rel (%p314) target = $region40
      $region39: #{text_clip_forward.1} parent=31 // pred_region
        %p317 = scmp.lt.s32.totalorder %s16, 1
        %s318 = scalar_select %p317, %s16, 1
        %s319 = smul.addr %s318, 12
        %s320 = smul.addr %s319, 4
        %s321 = scalar_lea.vmem %s4, %s320
      $region40: #{text_clip_forward.1} parent=31 // pred_fallthru
        _
      // Predicated region
      $region41: #{text_clip_forward.1} parent=31 // pred_check
        %p322 = pneg %p151
      $region42: #{text_clip_forward.1} parent=31 // pred_check_branch
        %324 = sbr.rel (%p322) target = $region44
      $region43: #{text_clip_forward.1} parent=31 // pred_region
        %p325 = scmp.lt.s32.totalorder %s16, 1
        %s326 = scalar_select %p325, %s16, 1
        %s327 = smul.addr %s326, 4
        %s328 = smul.addr %s327, 4
        %s329 = scalar_lea.vmem %s5, %s328
      $region44: #{text_clip_forward.1} parent=31 // pred_fallthru
        _
      // Predicated region
      $region45: #{text_clip_forward.1} parent=31 // pred_check
        %p330 = pneg %p177
      $region46: #{text_clip_forward.1} parent=31 // pred_check_branch
        %332 = sbr.rel (%p330) target = $region48
      $region47: #{text_clip_forward.1} parent=31 // pred_region
        %p333 = scmp.lt.s32.totalorder %s16, 1
        %s334 = scalar_select %p333, %s16, 1
        %s335 = scalar_lea.vmem %s6, %s334
      $region48: #{text_clip_forward.1} parent=31 // pred_fallthru
        _
      // Predicated region
      $region49: #{text_clip_forward.1} parent=31 // pred_check
        %p336 = pneg %p203
      $region50: #{text_clip_forward.1} parent=31 // pred_check_branch
        %338 = sbr.rel (%p336) target = $region52
      $region51: #{text_clip_forward.1} parent=31 // pred_region
        %p339 = scmp.lt.s32.totalorder %s16, 1
        %s340 = scalar_select %p339, %s16, 1
        %s341 = smul.addr %s340, 16
        %s342 = smul.addr %s341, 4
        %s343 = scalar_lea.vmem %s7, %s342
      $region52: #{text_clip_forward.1} parent=31 // pred_fallthru
        _
      // Predicated region
      $region53: #{text_clip_forward.1} parent=31 // pred_check
        %p344 = pneg %p229
      $region54: #{text_clip_forward.1} parent=31 // pred_check_branch
        %346 = sbr.rel (%p344) target = $region56
      $region55: #{text_clip_forward.1} parent=31 // pred_region
        %p347 = scmp.lt.s32.totalorder %s16, 1
        %s348 = scalar_select %p347, %s16, 1
        %s349 = smul.addr %s348, 16
        %s350 = smul.addr %s349, 4
        %s351 = scalar_lea.vmem %s8, %s350
      $region56: #{text_clip_forward.1} parent=31 // pred_fallthru
        _
    $region32: #{text_clip_forward.1} parent=5 // pred_fallthru
      _
    %p352 = scmp.le.s32.totalorder 1, %s16
    %p353 = scmp.lt.s32.totalorder %s16, 3
    %p354 = pnand %p352, %p353
    %p355 = pneg %p354
    // Predicated region
    $region57: #{text_clip_forward.1} parent=5 // pred_check
      _
    $region58: #{text_clip_forward.1} parent=5 // pred_check_branch
      %357 = sbr.rel (%p354) target = $region60
    $region59: #{text_clip_forward.1} parent=5 // pred_region
      %s358 = ssub.s32 %s16, 1
      %p359 = pneg %p37
      %p360 = pneg %p34
      %p361 = pneg %p58
      %p362 = pneg %p55
      %p363 = pneg %p79
      %p364 = pneg %p76
      %p365 = scmp.lt.s32.totalorder %s21, 1
      %s366 = scalar_select %p365, %s21, 1
      %s367 = scalar_lea.vmem %s3, %s366
      %p368 = pneg %p105
      %p369 = pneg %p102
      %p370 = scmp.lt.s32.totalorder %s21, 1
      %s371 = scalar_select %p370, %s21, 1
      %s372 = smul.addr %s371, 12
      %s373 = smul.addr %s372, 4
      %s374 = scalar_lea.vmem %s4, %s373
      %p375 = pneg %p131
      %p376 = pneg %p128
      %p377 = scmp.lt.s32.totalorder %s21, 1
      %s378 = scalar_select %p377, %s21, 1
      %s379 = smul.addr %s378, 4
      %s380 = smul.addr %s379, 4
      %s381 = scalar_lea.vmem %s5, %s380
      %p382 = pneg %p157
      %p383 = pneg %p154
      %p384 = scmp.lt.s32.totalorder %s21, 1
      %s385 = scalar_select %p384, %s21, 1
      %s386 = scalar_lea.vmem %s6, %s385
      %p387 = pneg %p183
      %p388 = pneg %p180
      %p389 = scmp.lt.s32.totalorder %s21, 1
      %s390 = scalar_select %p389, %s21, 1
      %s391 = smul.addr %s390, 16
      %s392 = smul.addr %s391, 4
      %s393 = scalar_lea.vmem %s7, %s392
      %p394 = pneg %p209
      %p395 = pneg %p206
      %p396 = scmp.lt.s32.totalorder %s21, 1
      %s397 = scalar_select %p396, %s21, 1
      %s398 = smul.addr %s397, 16
      %s399 = smul.addr %s398, 4
      %s400 = scalar_lea.vmem %s8, %s399
      %p401 = pneg %p235
      %p402 = pneg %p232
      %p403 = pneg %p256
      %p404 = pneg %p253
      %p405 = pneg %p277
      %p406 = pneg %p274
      %p407 = scmp.lt.s32.totalorder %s21, 1
      %s408 = scalar_select %p407, %s21, 1
      %s409 = scalar_lea.vmem %s3, %s408
      %p410 = scmp.lt.s32.totalorder %s21, 1
      %s411 = scalar_select %p410, %s21, 1
      %s412 = smul.addr %s411, 12
      %s413 = smul.addr %s412, 4
      %s414 = scalar_lea.vmem %s4, %s413
      %p415 = scmp.lt.s32.totalorder %s21, 1
      %s416 = scalar_select %p415, %s21, 1
      %s417 = smul.addr %s416, 4
      %s418 = smul.addr %s417, 4
      %s419 = scalar_lea.vmem %s5, %s418
      %p420 = scmp.lt.s32.totalorder %s21, 1
      %s421 = scalar_select %p420, %s21, 1
      %s422 = scalar_lea.vmem %s6, %s421
      %p423 = scmp.lt.s32.totalorder %s21, 1
      %s424 = scalar_select %p423, %s21, 1
      %s425 = smul.addr %s424, 16
      %s426 = smul.addr %s425, 4
      %s427 = scalar_lea.vmem %s7, %s426
      %p428 = scmp.lt.s32.totalorder %s21, 1
      %s429 = scalar_select %p428, %s21, 1
      %s430 = smul.addr %s429, 16
      %s431 = smul.addr %s430, 4
      %s432 = scalar_lea.vmem %s8, %s431
      %p434 = scmp.eq.s32.totalorder %s21, 0
      // Predicated region
      $region61: #{text_clip_forward.1} parent=59 // pred_check
        %p435 = pneg %p434
      $region62: #{text_clip_forward.1} parent=59 // pred_check_branch
        %437 = sbr.rel (%p435) target = $region64
      $region63: #{text_clip_forward.1} parent=59 // pred_region
        %v438 = vld [vmem:[%s0] sm:$0xff]
        %v439 = vld [vmem:[%s0 + $0x8] sm:$0xff]
        %440 = vst [vmem:[#allocation2] sm:$0xff] %v438
        %441 = vst [vmem:[#allocation2 + $0x8] sm:$0xff] %v439
      $region64: #{text_clip_forward.1} parent=59 // pred_fallthru
        _
      %v442 = vld [vmem:[#allocation2] sm:$0xff]
      %v443 = vld [vmem:[#allocation2 + $0x8] sm:$0xff]
      %v444 = vld [vmem:[%s409] sm:$0x1]
      %v445 = vmul.f32 %v442, %v442
      %v446 = vmul.f32 %v443, %v443
      %447 = vadd.xlane.f32.xlu0 %v445
      %v448 = vpop.xlane.xlu0 %447
      %449 = vadd.xlane.f32.xlu0 %v446
      %v450 = vpop.xlane.xlu0 %449
      %v451 = vmul.f32 %v448, 0.03125
      %v452 = vmul.f32 %v450, 0.03125
      %v453 = vadd.f32 %v451, 1e-06
      %v454 = vadd.f32 %v452, 1e-06
      %v455 = vrsqrt.pop %v453
      %v456 = vrsqrt.pop %v454
      %v457 = vmul.f32 %v442, %v455
      %v458 = vmul.f32 %v443, %v456
      %v460 = vlaneseq
      %v461 = vshrl.u32 %v460, 7
      %v462 = vsub.s32 0, %v461
      %v463 = vrot.slane %v444, %v462
      %v465 = vmul.f32 %v457, %v463
      %v466 = vmul.f32 %v458, %v463
      %v467 = vld [vmem:[%s414] sm:$0xf]
      %v468 = vld [vmem:[%s414 + $0x4] sm:$0xf]
      %v469 = vld [vmem:[%s414 + $0x8] sm:$0xf]
      %v470 = vld [vmem:[%s414 + $0xc] sm:$0xf]
      %v471 = vld [vmem:[%s414 + $0x10] sm:$0xf]
      %v472 = vld [vmem:[%s414 + $0x14] sm:$0xf]
      %v473 = vld [vmem:[%s414 + $0x18] sm:$0xf]
      %v474 = vld [vmem:[%s414 + $0x1c] sm:$0xf]
      %v475 = vld [vmem:[%s414 + $0x20] sm:$0xf]
      %v476 = vld [vmem:[%s414 + $0x24] sm:$0xf]
      %v477 = vld [vmem:[%s414 + $0x28] sm:$0xf]
      %v478 = vld [vmem:[%s414 + $0x2c] sm:$0xf]
      %v479 = vpack.c.bf16 %v466, %v465
      %v492 = vunpack.c.l.b16 %v467
      %v493 = vunpack.c.l.b16 %v468
      %v494 = vunpack.c.l.b16 %v469
      %v495 = vunpack.c.l.b16 %v470
      %v496 = vunpack.c.l.b16 %v471
      %v497 = vunpack.c.l.b16 %v472
      %v498 = vunpack.c.l.b16 %v473
      %v499 = vunpack.c.l.b16 %v474
      %v500 = vunpack.c.l.b16 %v475
      %v501 = vunpack.c.l.b16 %v476
      %v502 = vunpack.c.l.b16 %v477
      %v503 = vunpack.c.l.b16 %v478
      %v504 = vpack.c.b16 %v493, %v492
      %v505 = vpack.c.b16 %v495, %v494
      %v506 = vpack.c.b16 %v497, %v496
      %v507 = vpack.c.b16 %v499, %v498
      %v508 = vpack.c.b16 %v501, %v500
      %v509 = vpack.c.b16 %v503, %v502
      %516 = vmatprep.subr.bf16.mxu0 0
      %517 = vmatpush1.bf16.xpose.msra.mxu0 %v479
      %518 = vmatprep.subr.bf16.mxu0 0
      %519 = vmatpush1.bf16.xpose.msra.mxu0 0
      %520 = vmatprep.subr.bf16.mxu0 0
      %521 = vmatpush1.bf16.xpose.msra.mxu0 0
      %522 = vmatprep.subr.bf16.mxu0 0
      %523 = vmatpush1.bf16.xpose.msra.mxu0 0
      %524 = vmatprep.subr.bf16.mxu0 0
      %525 = vmatpush1.bf16.xpose.msra.mxu0 0
      %526 = vmatprep.subr.bf16.mxu0 0
      %527 = vmatpush1.bf16.xpose.msra.mxu0 0
      %528 = vmatprep.subr.bf16.mxu0 0
      %529 = vmatpush1.bf16.xpose.msra.mxu0 0
      %530 = vmatprep.subr.bf16.mxu0 0
      %531 = vmatpush1.bf16.xpose.msra.mxu0 0
      %532 = vmatprep.subr.bf16.mxu0 0
      %533 = vmatpush1.bf16.xpose.msra.mxu0 0
      %534 = vmatprep.subr.bf16.mxu0 0
      %535 = vmatpush1.bf16.xpose.msra.mxu0 0
      %536 = vmatprep.subr.bf16.mxu0 0
      %537 = vmatpush1.bf16.xpose.msra.mxu0 0
      %538 = vmatprep.subr.bf16.mxu0 0
      %539 = vmatpush1.bf16.xpose.msra.mxu0 0
      %540 = vmatprep.subr.bf16.mxu0 0
      %541 = vmatpush1.bf16.xpose.msra.mxu0 0
      %542 = vmatprep.subr.bf16.mxu0 0
      %543 = vmatpush1.bf16.xpose.msra.mxu0 0
      %544 = vmatprep.subr.bf16.mxu0 0
      %545 = vmatpush1.bf16.xpose.msra.mxu0 0
      %546 = vmatprep.subr.bf16.mxu0 0
      %547 = vmatpush1.bf16.xpose.msra.mxu0 0
      %548 = vmatprep.mubr.bf16.mxu0 0
      %549 = vmatmul.mubr.bf16.gmra.mrb[0].mxu0 %v504
      %v550 = vpop.f32.mrb[0].mxu0
      %v551 = vadd.f32 0.0, %v550
      %v552 = vpop.f32.mrb[0].mxu0
      %v553 = vpop.f32.mrb[0].mxu0
      %v554 = vadd.f32 0.0, %v553
      %v555 = vpop.f32.mrb[0].mxu0
      %556 = vmatprep.mubr.bf16.mxu0 0
      %557 = vmatmul.mubr.bf16.gmra.mrb[0].mxu0 %v505
      %v558 = vpop.f32.mrb[0].mxu0
      %v559 = vadd.f32 0.0, %v558
      %v560 = vpop.f32.mrb[0].mxu0
      %v561 = vpop.f32.mrb[0].mxu0
      %v562 = vadd.f32 0.0, %v561
      %v563 = vpop.f32.mrb[0].mxu0
      %564 = vmatprep.mubr.bf16.mxu0 0
      %565 = vmatmul.mubr.bf16.gmra.mrb[0].mxu0 %v506
      %v566 = vpop.f32.mrb[0].mxu0
      %v567 = vadd.f32 0.0, %v566
      %v568 = vpop.f32.mrb[0].mxu0
      %v569 = vpop.f32.mrb[0].mxu0
      %v570 = vadd.f32 0.0, %v569
      %v571 = vpop.f32.mrb[0].mxu0
      %572 = vmatprep.mubr.bf16.mxu0 0
      %573 = vmatmul.mubr.bf16.gmra.mrb[0].mxu0 %v507
      %v574 = vpop.f32.mrb[0].mxu0
      %v575 = vadd.f32 0.0, %v574
      %v576 = vpop.f32.mrb[0].mxu0
      %v577 = vpop.f32.mrb[0].mxu0
      %v578 = vadd.f32 0.0, %v577
      %v579 = vpop.f32.mrb[0].mxu0
      %580 = vmatprep.mubr.bf16.mxu0 0
      %581 = vmatmul.mubr.bf16.gmra.mrb[0].mxu0 %v508
      %v582 = vpop.f32.mrb[0].mxu0
      %v583 = vadd.f32 0.0, %v582
      %v584 = vpop.f32.mrb[0].mxu0
      %v585 = vpop.f32.mrb[0].mxu0
      %v586 = vadd.f32 0.0, %v585
      %v587 = vpop.f32.mrb[0].mxu0
      %588 = vmatprep.mubr.bf16.mxu0 0
      %589 = vmatmul.mubr.bf16.gmra.mrb[0].mxu0 %v509
      %v590 = vpop.f32.mrb[0].mxu0
      %v591 = vadd.f32 0.0, %v590
      %v592 = vpop.f32.mrb[0].mxu0
      %v593 = vpop.f32.mrb[0].mxu0
      %v594 = vadd.f32 0.0, %v593
      %v595 = vpop.f32.mrb[0].mxu0
      %596 = vdwg.mxu0
      %597 = vxpose.xlu0.b32.start [1/16] %v551, 128
      %598 = vxpose.xlu0.b32.cont [2/16] 0.0, 128
      %599 = vxpose.xlu0.b32.cont [3/16] 0.0, 128
      %600 = vxpose.xlu0.b32.cont [4/16] 0.0, 128
      %601 = vxpose.xlu0.b32.cont [5/16] 0.0, 128
      %602 = vxpose.xlu0.b32.cont [6/16] 0.0, 128
      %603 = vxpose.xlu0.b32.cont [7/16] 0.0, 128
      %604 = vxpose.xlu0.b32.cont [8/16] 0.0, 128
      %605 = vxpose.xlu0.b32.cont [9/16] 0.0, 128
      %606 = vxpose.xlu0.b32.cont [10/16] 0.0, 128
      %607 = vxpose.xlu0.b32.cont [11/16] 0.0, 128
      %608 = vxpose.xlu0.b32.cont [12/16] 0.0, 128
      %609 = vxpose.xlu0.b32.cont [13/16] 0.0, 128
      %610 = vxpose.xlu0.b32.cont [14/16] 0.0, 128
      %611 = vxpose.xlu0.b32.cont [15/16] 0.0, 128
      %612 = vxpose.xlu0.b32.end [16/16] 0.0, 128
      %v613 = vpop.trf.xlu0
      %v614 = vpop.trf.xlu0
      %v615 = vpop.trf.xlu0
      %v616 = vpop.trf.xlu0
      %v617 = vpop.trf.xlu0
      %v618 = vpop.trf.xlu0
      %v619 = vpop.trf.xlu0
      %v620 = vpop.trf.xlu0
      %v621 = vpop.trf.xlu0
      %v622 = vpop.trf.xlu0
      %v623 = vpop.trf.xlu0
      %v624 = vpop.trf.xlu0
      %v625 = vpop.trf.xlu0
      %v626 = vpop.trf.xlu0
      %v627 = vpop.trf.xlu0
      %v628 = vpop.trf.xlu0
      %629 = vxpose.xlu0.b32.start [1/16] %v554, 128
      %630 = vxpose.xlu0.b32.cont [2/16] 0.0, 128
      %631 = vxpose.xlu0.b32.cont [3/16] 0.0, 128
      %632 = vxpose.xlu0.b32.cont [4/16] 0.0, 128
      %633 = vxpose.xlu0.b32.cont [5/16] 0.0, 128
      %634 = vxpose.xlu0.b32.cont [6/16] 0.0, 128
      %635 = vxpose.xlu0.b32.cont [7/16] 0.0, 128
      %636 = vxpose.xlu0.b32.cont [8/16] 0.0, 128
      %637 = vxpose.xlu0.b32.cont [9/16] 0.0, 128
      %638 = vxpose.xlu0.b32.cont [10/16] 0.0, 128
      %639 = vxpose.xlu0.b32.cont [11/16] 0.0, 128
      %640 = vxpose.xlu0.b32.cont [12/16] 0.0, 128
      %641 = vxpose.xlu0.b32.cont [13/16] 0.0, 128
      %642 = vxpose.xlu0.b32.cont [14/16] 0.0, 128
      %643 = vxpose.xlu0.b32.cont [15/16] 0.0, 128
      %644 = vxpose.xlu0.b32.end [16/16] 0.0, 128
      %v645 = vpop.trf.xlu0
      %v646 = vpop.trf.xlu0
      %v647 = vpop.trf.xlu0
      %v648 = vpop.trf.xlu0
      %v649 = vpop.trf.xlu0
      %v650 = vpop.trf.xlu0
      %v651 = vpop.trf.xlu0
      %v652 = vpop.trf.xlu0
      %v653 = vpop.trf.xlu0
      %v654 = vpop.trf.xlu0
      %v655 = vpop.trf.xlu0
      %v656 = vpop.trf.xlu0
      %v657 = vpop.trf.xlu0
      %v658 = vpop.trf.xlu0
      %v659 = vpop.trf.xlu0
      %v660 = vpop.trf.xlu0
      %661 = vxpose.xlu0.b32.start [1/16] %v559, 128
      %662 = vxpose.xlu0.b32.cont [2/16] 0.0, 128
      %663 = vxpose.xlu0.b32.cont [3/16] 0.0, 128
      %664 = vxpose.xlu0.b32.cont [4/16] 0.0, 128
      %665 = vxpose.xlu0.b32.cont [5/16] 0.0, 128
      %666 = vxpose.xlu0.b32.cont [6/16] 0.0, 128
      %667 = vxpose.xlu0.b32.cont [7/16] 0.0, 128
      %668 = vxpose.xlu0.b32.cont [8/16] 0.0, 128
      %669 = vxpose.xlu0.b32.cont [9/16] 0.0, 128
      %670 = vxpose.xlu0.b32.cont [10/16] 0.0, 128
      %671 = vxpose.xlu0.b32.cont [11/16] 0.0, 128
      %672 = vxpose.xlu0.b32.cont [12/16] 0.0, 128
      %673 = vxpose.xlu0.b32.cont [13/16] 0.0, 128
      %674 = vxpose.xlu0.b32.cont [14/16] 0.0, 128
      %675 = vxpose.xlu0.b32.cont [15/16] 0.0, 128
      %676 = vxpose.xlu0.b32.end [16/16] 0.0, 128
      %v677 = vpop.trf.xlu0
      %v678 = vpop.trf.xlu0
      %v679 = vpop.trf.xlu0
      %v680 = vpop.trf.xlu0
      %v681 = vpop.trf.xlu0
      %v682 = vpop.trf.xlu0
      %v683 = vpop.trf.xlu0
      %v684 = vpop.trf.xlu0
      %v685 = vpop.trf.xlu0
      %v686 = vpop.trf.xlu0
      %v687 = vpop.trf.xlu0
      %v688 = vpop.trf.xlu0
      %v689 = vpop.trf.xlu0
      %v690 = vpop.trf.xlu0
      %v691 = vpop.trf.xlu0
      %v692 = vpop.trf.xlu0
      %693 = vxpose.xlu0.b32.start [1/16] %v562, 128
      %694 = vxpose.xlu0.b32.cont [2/16] 0.0, 128
      %695 = vxpose.xlu0.b32.cont [3/16] 0.0, 128
      %696 = vxpose.xlu0.b32.cont [4/16] 0.0, 128
      %697 = vxpose.xlu0.b32.cont [5/16] 0.0, 128
      %698 = vxpose.xlu0.b32.cont [6/16] 0.0, 128
      %699 = vxpose.xlu0.b32.cont [7/16] 0.0, 128
      %700 = vxpose.xlu0.b32.cont [8/16] 0.0, 128
      %701 = vxpose.xlu0.b32.cont [9/16] 0.0, 128
      %702 = vxpose.xlu0.b32.cont [10/16] 0.0, 128
      %703 = vxpose.xlu0.b32.cont [11/16] 0.0, 128
      %704 = vxpose.xlu0.b32.cont [12/16] 0.0, 128
      %705 = vxpose.xlu0.b32.cont [13/16] 0.0, 128
      %706 = vxpose.xlu0.b32.cont [14/16] 0.0, 128
      %707 = vxpose.xlu0.b32.cont [15/16] 0.0, 128
      %708 = vxpose.xlu0.b32.end [16/16] 0.0, 128
      %v709 = vpop.trf.xlu0
      %v710 = vpop.trf.xlu0
      %v711 = vpop.trf.xlu0
      %v712 = vpop.trf.xlu0
      %v713 = vpop.trf.xlu0
      %v714 = vpop.trf.xlu0
      %v715 = vpop.trf.xlu0
      %v716 = vpop.trf.xlu0
      %v717 = vpop.trf.xlu0
      %v718 = vpop.trf.xlu0
      %v719 = vpop.trf.xlu0
      %v720 = vpop.trf.xlu0
      %v721 = vpop.trf.xlu0
      %v722 = vpop.trf.xlu0
      %v723 = vpop.trf.xlu0
      %v724 = vpop.trf.xlu0
      %v725 = vld [vmem:[%s1] sm:$0xff]
      %v726 = vld [vmem:[%s1 + $0x8] sm:$0xff]
      %v727 = vld [vmem:[%s1 + $0x10] sm:$0xff]
      %v728 = vld [vmem:[%s1 + $0x18] sm:$0xff]
      %v729 = vld [vmem:[%s2] sm:$0x3]
      %v730 = vld [vmem:[%s419] sm:$0xf]
      %v731 = vld [vmem:[%s419 + $0x4] sm:$0xf]
      %v732 = vld [vmem:[%s419 + $0x8] sm:$0xf]
      %v733 = vld [vmem:[%s419 + $0xc] sm:$0xf]
      %v734 = vpack.c.bf16 %v613, %v613
      %v735 = vpack.c.bf16 %v645, %v645
      %v736 = vpack.c.bf16 %v677, %v677
      %v737 = vpack.c.bf16 %v709, %v709
      %v738 = vpack.c.bf16 %v567, %v567
      %v739 = vpack.c.bf16 %v570, %v570
      %v740 = vpack.c.bf16 %v575, %v575
      %v741 = vpack.c.bf16 %v578, %v578
      %v742 = vpack.c.bf16 %v583, %v583
      %v743 = vpack.c.bf16 %v586, %v586
      %v744 = vpack.c.bf16 %v591, %v591
      %v745 = vpack.c.bf16 %v594, %v594
      %vm746 = vcmask 64512
      %v748 = vsel %vm746, %v734, 0
      %vm750 = vcmask 1043456
      %v752 = vsel %vm750, %v738, 0
      %754 = vmatprep.subr.bf16.mxu0 0
      %755 = vmatpush1.bf16.msra.mxu0 %v752
      %756 = vmatprep.subr.bf16.mxu0 0
      %757 = vmatpush1.bf16.msra.mxu0 0
      %758 = vmatprep.subr.bf16.mxu0 0
      %759 = vmatpush1.bf16.msra.mxu0 0
      %760 = vmatprep.subr.bf16.mxu0 0
      %761 = vmatpush1.bf16.msra.mxu0 0
      %762 = vmatprep.subr.bf16.mxu0 0
      %763 = vmatpush1.bf16.msra.mxu0 0
      %764 = vmatprep.subr.bf16.mxu0 0
      %765 = vmatpush1.bf16.msra.mxu0 0
      %766 = vmatprep.subr.bf16.mxu0 0
      %767 = vmatpush1.bf16.msra.mxu0 0
      %768 = vmatprep.subr.bf16.mxu0 0
      %769 = vmatpush1.bf16.msra.mxu0 0
      %770 = vmatprep.subr.bf16.mxu0 0
      %771 = vmatpush1.bf16.msra.mxu0 0
      %772 = vmatprep.subr.bf16.mxu0 0
      %773 = vmatpush1.bf16.msra.mxu0 0
      %774 = vmatprep.subr.bf16.mxu0 0
      %775 = vmatpush1.bf16.msra.mxu0 0
      %776 = vmatprep.subr.bf16.mxu0 0
      %777 = vmatpush1.bf16.msra.mxu0 0
      %778 = vmatprep.subr.bf16.mxu0 0
      %779 = vmatpush1.bf16.msra.mxu0 0
      %780 = vmatprep.subr.bf16.mxu0 0
      %781 = vmatpush1.bf16.msra.mxu0 0
      %782 = vmatprep.subr.bf16.mxu0 0
      %783 = vmatpush1.bf16.msra.mxu0 0
      %784 = vmatprep.subr.bf16.mxu0 0
      %785 = vmatpush1.bf16.msra.mxu0 0
      %786 = vmatprep.mubr.bf16.mxu0 0
      %787 = vmatmul.mubr.bf16.gmra.mrb[0].mxu0 %v748
      %v788 = vpop.f32.mrb[0].mxu0
      %v789 = vadd.f32 %v725, %v788
      %v790 = vpop.f32.mrb[0].mxu0
      %v791 = vpop.f32.mrb[0].mxu0
      %v792 = vpop.f32.mrb[0].mxu0
      %793 = vdwg.mxu0
      %v795 = vsel %vm746, %v735, 0
      %v798 = vsel %vm750, %v739, 0
      %800 = vmatprep.subr.bf16.mxu0 0
      %801 = vmatpush1.bf16.msra.mxu0 %v798
      %802 = vmatprep.subr.bf16.mxu0 0
      %803 = vmatpush1.bf16.msra.mxu0 0
      %804 = vmatprep.subr.bf16.mxu0 0
      %805 = vmatpush1.bf16.msra.mxu0 0
      %806 = vmatprep.subr.bf16.mxu0 0
      %807 = vmatpush1.bf16.msra.mxu0 0
      %808 = vmatprep.subr.bf16.mxu0 0
      %809 = vmatpush1.bf16.msra.mxu0 0
      %810 = vmatprep.subr.bf16.mxu0 0
      %811 = vmatpush1.bf16.msra.mxu0 0
      %812 = vmatprep.subr.bf16.mxu0 0
      %813 = vmatpush1.bf16.msra.mxu0 0
      %814 = vmatprep.subr.bf16.mxu0 0
      %815 = vmatpush1.bf16.msra.mxu0 0
      %816 = vmatprep.subr.bf16.mxu0 0
      %817 = vmatpush1.bf16.msra.mxu0 0
      %818 = vmatprep.subr.bf16.mxu0 0
      %819 = vmatpush1.bf16.msra.mxu0 0
      %820 = vmatprep.subr.bf16.mxu0 0
      %821 = vmatpush1.bf16.msra.mxu0 0
      %822 = vmatprep.subr.bf16.mxu0 0
      %823 = vmatpush1.bf16.msra.mxu0 0
      %824 = vmatprep.subr.bf16.mxu0 0
      %825 = vmatpush1.bf16.msra.mxu0 0
      %826 = vmatprep.subr.bf16.mxu0 0
      %827 = vmatpush1.bf16.msra.mxu0 0
      %828 = vmatprep.subr.bf16.mxu0 0
      %829 = vmatpush1.bf16.msra.mxu0 0
      %830 = vmatprep.subr.bf16.mxu0 0
      %831 = vmatpush1.bf16.msra.mxu0 0
      %832 = vmatprep.mubr.bf16.mxu0 0
      %833 = vmatmul.mubr.bf16.gmra.mrb[0].mxu0 %v795
      %v834 = vpop.f32.mrb[0].mxu0
      %v835 = vadd.f32 %v726, %v834
      %v836 = vpop.f32.mrb[0].mxu0
      %v837 = vpop.f32.mrb[0].mxu0
      %v838 = vpop.f32.mrb[0].mxu0
      %839 = vdwg.mxu0
      %v841 = vsel %vm746, %v736, 0
      %v844 = vsel %vm750, %v740, 0
      %846 = vmatprep.subr.bf16.mxu0 0
      %847 = vmatpush1.bf16.msra.mxu0 %v844
      %848 = vmatprep.subr.bf16.mxu0 0
      %849 = vmatpush1.bf16.msra.mxu0 0
      %850 = vmatprep.subr.bf16.mxu0 0
      %851 = vmatpush1.bf16.msra.mxu0 0
      %852 = vmatprep.subr.bf16.mxu0 0
      %853 = vmatpush1.bf16.msra.mxu0 0
      %854 = vmatprep.subr.bf16.mxu0 0
      %855 = vmatpush1.bf16.msra.mxu0 0
      %856 = vmatprep.subr.bf16.mxu0 0
      %857 = vmatpush1.bf16.msra.mxu0 0
      %858 = vmatprep.subr.bf16.mxu0 0
      %859 = vmatpush1.bf16.msra.mxu0 0
      %860 = vmatprep.subr.bf16.mxu0 0
      %861 = vmatpush1.bf16.msra.mxu0 0
      %862 = vmatprep.subr.bf16.mxu0 0
      %863 = vmatpush1.bf16.msra.mxu0 0
      %864 = vmatprep.subr.bf16.mxu0 0
      %865 = vmatpush1.bf16.msra.mxu0 0
      %866 = vmatprep.subr.bf16.mxu0 0
      %867 = vmatpush1.bf16.msra.mxu0 0
      %868 = vmatprep.subr.bf16.mxu0 0
      %869 = vmatpush1.bf16.msra.mxu0 0
      %870 = vmatprep.subr.bf16.mxu0 0
      %871 = vmatpush1.bf16.msra.mxu0 0
      %872 = vmatprep.subr.bf16.mxu0 0
      %873 = vmatpush1.bf16.msra.mxu0 0
      %874 = vmatprep.subr.bf16.mxu0 0
      %875 = vmatpush1.bf16.msra.mxu0 0
      %876 = vmatprep.subr.bf16.mxu0 0
      %877 = vmatpush1.bf16.msra.mxu0 0
      %878 = vmatprep.mubr.bf16.mxu0 0
      %879 = vmatmul.mubr.bf16.gmra.mrb[0].mxu0 %v841
      %v880 = vpop.f32.mrb[0].mxu0
      %v881 = vadd.f32 %v727, %v880
      %v882 = vpop.f32.mrb[0].mxu0
      %v883 = vpop.f32.mrb[0].mxu0
      %v884 = vpop.f32.mrb[0].mxu0
      %885 = vdwg.mxu0
      %v887 = vsel %vm746, %v737, 0
      %v890 = vsel %vm750, %v741, 0
      %892 = vmatprep.subr.bf16.mxu0 0
      %893 = vmatpush1.bf16.msra.mxu0 %v890
      %894 = vmatprep.subr.bf16.mxu0 0
      %895 = vmatpush1.bf16.msra.mxu0 0
      %896 = vmatprep.subr.bf16.mxu0 0
      %897 = vmatpush1.bf16.msra.mxu0 0
      %898 = vmatprep.subr.bf16.mxu0 0
      %899 = vmatpush1.bf16.msra.mxu0 0
      %900 = vmatprep.subr.bf16.mxu0 0
      %901 = vmatpush1.bf16.msra.mxu0 0
      %902 = vmatprep.subr.bf16.mxu0 0
      %903 = vmatpush1.bf16.msra.mxu0 0
      %904 = vmatprep.subr.bf16.mxu0 0
      %905 = vmatpush1.bf16.msra.mxu0 0
      %906 = vmatprep.subr.bf16.mxu0 0
      %907 = vmatpush1.bf16.msra.mxu0 0
      %908 = vmatprep.subr.bf16.mxu0 0
      %909 = vmatpush1.bf16.msra.mxu0 0
      %910 = vmatprep.subr.bf16.mxu0 0
      %911 = vmatpush1.bf16.msra.mxu0 0
      %912 = vmatprep.subr.bf16.mxu0 0
      %913 = vmatpush1.bf16.msra.mxu0 0
      %914 = vmatprep.subr.bf16.mxu0 0
      %915 = vmatpush1.bf16.msra.mxu0 0
      %916 = vmatprep.subr.bf16.mxu0 0
      %917 = vmatpush1.bf16.msra.mxu0 0
      %918 = vmatprep.subr.bf16.mxu0 0
      %919 = vmatpush1.bf16.msra.mxu0 0
      %920 = vmatprep.subr.bf16.mxu0 0
      %921 = vmatpush1.bf16.msra.mxu0 0
      %922 = vmatprep.subr.bf16.mxu0 0
      %923 = vmatpush1.bf16.msra.mxu0 0
      %924 = vmatprep.mubr.bf16.mxu0 0
      %925 = vmatmul.mubr.bf16.gmra.mrb[0].mxu0 %v887
      %v926 = vpop.f32.mrb[0].mxu0
      %v927 = vadd.f32 %v728, %v926
      %v928 = vpop.f32.mrb[0].mxu0
      %v929 = vpop.f32.mrb[0].mxu0
      %v930 = vpop.f32.mrb[0].mxu0
      %931 = vdwg.mxu0
      %v932 = vlaneseq
      %v933 = vshrl.u32 %v932, 7
      %v934 = vsub.s32 0, %v933
      %v935 = vrot.slane %v729, %v934
      %v936 = vadd.f32 %v789, %v935
      %v937 = vadd.f32 %v835, %v935
      %v938 = vadd.f32 %v881, %v935
      %v939 = vadd.f32 %v927, %v935
      %v940 = vsel %vm746, %v936, -inf
      %941 = vmax.xlane.f32.xlu0 %v940
      %v942 = vpop.xlane.xlu0 %941
      %v943 = vsel %vm746, %v937, -inf
      %944 = vmax.xlane.f32.xlu0 %v943
      %v945 = vpop.xlane.xlu0 %944
      %v946 = vsel %vm746, %v938, -inf
      %947 = vmax.xlane.f32.xlu0 %v946
      %v948 = vpop.xlane.xlu0 %947
      %v949 = vsel %vm746, %v939, -inf
      %950 = vmax.xlane.f32.xlu0 %v949
      %v951 = vpop.xlane.xlu0 %950
      %v952 = vsub.f32 %v936, %v942
      %v953 = vsub.f32 %v937, %v945
      %v954 = vsub.f32 %v938, %v948
      %v955 = vsub.f32 %v939, %v951
      %v956 = vmul.f32 %v952, 1.442695
      %v957 = vpow.pop %v956
      %v958 = vmul.f32 %v953, 1.442695
      %v959 = vpow.pop %v958
      %v960 = vmul.f32 %v954, 1.442695
      %v961 = vpow.pop %v960
      %v962 = vmul.f32 %v955, 1.442695
      %v963 = vpow.pop %v962
      %v964 = vsel %vm746, %v957, 0.0
      %965 = vadd.xlane.f32.xlu0 %v964
      %v966 = vpop.xlane.xlu0 %965
      %v967 = vsel %vm746, %v959, 0.0
      %968 = vadd.xlane.f32.xlu0 %v967
      %v969 = vpop.xlane.xlu0 %968
      %v970 = vsel %vm746, %v961, 0.0
      %971 = vadd.xlane.f32.xlu0 %v970
      %v972 = vpop.xlane.xlu0 %971
      %v973 = vsel %vm746, %v963, 0.0
      %974 = vadd.xlane.f32.xlu0 %v973
      %v975 = vpop.xlane.xlu0 %974
      %v976 = vpack.c.bf16 %v957, %v957
      %v977 = vpack.c.bf16 %v959, %v959
      %v978 = vpack.c.bf16 %v961, %v961
      %v979 = vpack.c.bf16 %v963, %v963
      %v981 = vsel %vm746, %v976, 0
      %v984 = vsel %vm746, %v742, 0
      %986 = vmatprep.subr.bf16.mxu0 0
      %987 = vmatpush1.bf16.xpose.msra.mxu0 %v984
      %988 = vmatprep.subr.bf16.mxu0 0
      %989 = vmatpush1.bf16.xpose.msra.mxu0 0
      %990 = vmatprep.subr.bf16.mxu0 0
      %991 = vmatpush1.bf16.xpose.msra.mxu0 0
      %992 = vmatprep.subr.bf16.mxu0 0
      %993 = vmatpush1.bf16.xpose.msra.mxu0 0
      %994 = vmatprep.subr.bf16.mxu0 0
      %995 = vmatpush1.bf16.xpose.msra.mxu0 0
      %996 = vmatprep.subr.bf16.mxu0 0
      %997 = vmatpush1.bf16.xpose.msra.mxu0 0
      %998 = vmatprep.subr.bf16.mxu0 0
      %999 = vmatpush1.bf16.xpose.msra.mxu0 0
      %1000 = vmatprep.subr.bf16.mxu0 0
      %1001 = vmatpush1.bf16.xpose.msra.mxu0 0
      %1002 = vmatprep.subr.bf16.mxu0 0
      %1003 = vmatpush1.bf16.xpose.msra.mxu0 0
      %1004 = vmatprep.subr.bf16.mxu0 0
      %1005 = vmatpush1.bf16.xpose.msra.mxu0 0
      %1006 = vmatprep.subr.bf16.mxu0 0
      %1007 = vmatpush1.bf16.xpose.msra.mxu0 0
      %1008 = vmatprep.subr.bf16.mxu0 0
      %1009 = vmatpush1.bf16.xpose.msra.mxu0 0
      %1010 = vmatprep.subr.bf16.mxu0 0
      %1011 = vmatpush1.bf16.xpose.msra.mxu0 0
      %1012 = vmatprep.subr.bf16.mxu0 0
      %1013 = vmatpush1.bf16.xpose.msra.mxu0 0
      %1014 = vmatprep.subr.bf16.mxu0 0
      %1015 = vmatpush1.bf16.xpose.msra.mxu0 0
      %1016 = vmatprep.subr.bf16.mxu0 0
      %1017 = vmatpush1.bf16.xpose.msra.mxu0 0
      %1018 = vmatprep.mubr.bf16.mxu0 0
      %1019 = vmatmul.mubr.bf16.gmra.mrb[0].mxu0 %v981
      %v1020 = vpop.f32.mrb[0].mxu0
      %v1021 = vadd.f32 0.0, %v1020
      %v1022 = vpop.f32.mrb[0].mxu0
      %v1023 = vpop.f32.mrb[0].mxu0
      %v1024 = vpop.f32.mrb[0].mxu0
      %1025 = vdwg.mxu0
      %v1027 = vsel %vm746, %v977, 0
      %v1030 = vsel %vm746, %v743, 0
      %1032 = vmatprep.subr.bf16.mxu0 0
      %1033 = vmatpush1.bf16.xpose.msra.mxu0 %v1030
      %1034 = vmatprep.subr.bf16.mxu0 0
      %1035 = vmatpush1.bf16.xpose.msra.mxu0 0
      %1036 = vmatprep.subr.bf16.mxu0 0
      %1037 = vmatpush1.bf16.xpose.msra.mxu0 0
      %1038 = vmatprep.subr.bf16.mxu0 0
      %1039 = vmatpush1.bf16.xpose.msra.mxu0 0
      %1040 = vmatprep.subr.bf16.mxu0 0
      %1041 = vmatpush1.bf16.xpose.msra.mxu0 0
      %1042 = vmatprep.subr.bf16.mxu0 0
      %1043 = vmatpush1.bf16.xpose.msra.mxu0 0
      %1044 = vmatprep.subr.bf16.mxu0 0
      %1045 = vmatpush1.bf16.xpose.msra.mxu0 0
      %1046 = vmatprep.subr.bf16.mxu0 0
      %1047 = vmatpush1.bf16.xpose.msra.mxu0 0
      %1048 = vmatprep.subr.bf16.mxu0 0
      %1049 = vmatpush1.bf16.xpose.msra.mxu0 0
      %1050 = vmatprep.subr.bf16.mxu0 0
      %1051 = vmatpush1.bf16.xpose.msra.mxu0 0
      %1052 = vmatprep.subr.bf16.mxu0 0
      %1053 = vmatpush1.bf16.xpose.msra.mxu0 0
      %1054 = vmatprep.subr.bf16.mxu0 0
      %1055 = vmatpush1.bf16.xpose.msra.mxu0 0
      %1056 = vmatprep.subr.bf16.mxu0 0
      %1057 = vmatpush1.bf16.xpose.msra.mxu0 0
      %1058 = vmatprep.subr.bf16.mxu0 0
      %1059 = vmatpush1.bf16.xpose.msra.mxu0 0
      %1060 = vmatprep.subr.bf16.mxu0 0
      %1061 = vmatpush1.bf16.xpose.msra.mxu0 0
      %1062 = vmatprep.subr.bf16.mxu0 0
      %1063 = vmatpush1.bf16.xpose.msra.mxu0 0
      %1064 = vmatprep.mubr.bf16.mxu0 0
      %1065 = vmatmul.mubr.bf16.gmra.mrb[0].mxu0 %v1027
      %v1066 = vpop.f32.mrb[0].mxu0
      %v1067 = vadd.f32 0.0, %v1066
      %v1068 = vpop.f32.mrb[0].mxu0
      %v1069 = vpop.f32.mrb[0].mxu0
      %v1070 = vpop.f32.mrb[0].mxu0
      %1071 = vdwg.mxu0
      %v1073 = vsel %vm746, %v978, 0
      %v1076 = vsel %vm746, %v744, 0
      %1078 = vmatprep.subr.bf16.mxu0 0
      %1079 = vmatpush1.bf16.xpose.msra.mxu0 %v1076
      %1080 = vmatprep.subr.bf16.mxu0 0
      %1081 = vmatpush1.bf16.xpose.msra.mxu0 0
      %1082 = vmatprep.subr.bf16.mxu0 0
      %1083 = vmatpush1.bf16.xpose.msra.mxu0 0
      %1084 = vmatprep.subr.bf16.mxu0 0
      %1085 = vmatpush1.bf16.xpose.msra.mxu0 0
      %1086 = vmatprep.subr.bf16.mxu0 0
      %1087 = vmatpush1.bf16.xpose.msra.mxu0 0
      %1088 = vmatprep.subr.bf16.mxu0 0
      %1089 = vmatpush1.bf16.xpose.msra.mxu0 0
      %1090 = vmatprep.subr.bf16.mxu0 0
      %1091 = vmatpush1.bf16.xpose.msra.mxu0 0
      %1092 = vmatprep.subr.bf16.mxu0 0
      %1093 = vmatpush1.bf16.xpose.msra.mxu0 0
      %1094 = vmatprep.subr.bf16.mxu0 0
      %1095 = vmatpush1.bf16.xpose.msra.mxu0 0
      %1096 = vmatprep.subr.bf16.mxu0 0
      %1097 = vmatpush1.bf16.xpose.msra.mxu0 0
      %1098 = vmatprep.subr.bf16.mxu0 0
      %1099 = vmatpush1.bf16.xpose.msra.mxu0 0
      %1100 = vmatprep.subr.bf16.mxu0 0
      %1101 = vmatpush1.bf16.xpose.msra.mxu0 0
      %1102 = vmatprep.subr.bf16.mxu0 0
      %1103 = vmatpush1.bf16.xpose.msra.mxu0 0
      %1104 = vmatprep.subr.bf16.mxu0 0
      %1105 = vmatpush1.bf16.xpose.msra.mxu0 0
      %1106 = vmatprep.subr.bf16.mxu0 0
      %1107 = vmatpush1.bf16.xpose.msra.mxu0 0
      %1108 = vmatprep.subr.bf16.mxu0 0
      %1109 = vmatpush1.bf16.xpose.msra.mxu0 0
      %1110 = vmatprep.mubr.bf16.mxu0 0
      %1111 = vmatmul.mubr.bf16.gmra.mrb[0].mxu0 %v1073
      %v1112 = vpop.f32.mrb[0].mxu0
      %v1113 = vadd.f32 0.0, %v1112
      %v1114 = vpop.f32.mrb[0].mxu0
      %v1115 = vpop.f32.mrb[0].mxu0
      %v1116 = vpop.f32.mrb[0].mxu0
      %1117 = vdwg.mxu0
      %v1119 = vsel %vm746, %v979, 0
      %v1122 = vsel %vm746, %v745, 0
      %1124 = vmatprep.subr.bf16.mxu0 0
      %1125 = vmatpush1.bf16.xpose.msra.mxu0 %v1122
      %1126 = vmatprep.subr.bf16.mxu0 0
      %1127 = vmatpush1.bf16.xpose.msra.mxu0 0
      %1128 = vmatprep.subr.bf16.mxu0 0
      %1129 = vmatpush1.bf16.xpose.msra.mxu0 0
      %1130 = vmatprep.subr.bf16.mxu0 0
      %1131 = vmatpush1.bf16.xpose.msra.mxu0 0
      %1132 = vmatprep.subr.bf16.mxu0 0
      %1133 = vmatpush1.bf16.xpose.msra.mxu0 0
      %1134 = vmatprep.subr.bf16.mxu0 0
      %1135 = vmatpush1.bf16.xpose.msra.mxu0 0
      %1136 = vmatprep.subr.bf16.mxu0 0
      %1137 = vmatpush1.bf16.xpose.msra.mxu0 0
      %1138 = vmatprep.subr.bf16.mxu0 0
      %1139 = vmatpush1.bf16.xpose.msra.mxu0 0
      %1140 = vmatprep.subr.bf16.mxu0 0
      %1141 = vmatpush1.bf16.xpose.msra.mxu0 0
      %1142 = vmatprep.subr.bf16.mxu0 0
      %1143 = vmatpush1.bf16.xpose.msra.mxu0 0
      %1144 = vmatprep.subr.bf16.mxu0 0
      %1145 = vmatpush1.bf16.xpose.msra.mxu0 0
      %1146 = vmatprep.subr.bf16.mxu0 0
      %1147 = vmatpush1.bf16.xpose.msra.mxu0 0
      %1148 = vmatprep.subr.bf16.mxu0 0
      %1149 = vmatpush1.bf16.xpose.msra.mxu0 0
      %1150 = vmatprep.subr.bf16.mxu0 0
      %1151 = vmatpush1.bf16.xpose.msra.mxu0 0
      %1152 = vmatprep.subr.bf16.mxu0 0
      %1153 = vmatpush1.bf16.xpose.msra.mxu0 0
      %1154 = vmatprep.subr.bf16.mxu0 0
      %1155 = vmatpush1.bf16.xpose.msra.mxu0 0
      %1156 = vmatprep.mubr.bf16.mxu0 0
      %1157 = vmatmul.mubr.bf16.gmra.mrb[0].mxu0 %v1119
      %v1158 = vpop.f32.mrb[0].mxu0
      %v1159 = vadd.f32 0.0, %v1158
      %v1160 = vpop.f32.mrb[0].mxu0
      %v1161 = vpop.f32.mrb[0].mxu0
      %v1162 = vpop.f32.mrb[0].mxu0
      %1163 = vdwg.mxu0
      %v1164 = vrcp.pop %v966
      %v1165 = vrcp.pop %v969
      %v1166 = vrcp.pop %v972
      %v1167 = vrcp.pop %v975
      %v1168 = vmul.f32 %v1021, %v1164
      %v1169 = vmul.f32 %v1067, %v1165
      %v1170 = vmul.f32 %v1113, %v1166
      %v1171 = vmul.f32 %v1159, %v1167
      %v1172 = vpack.c.bf16 %v1168, %v1168
      %v1173 = vpack.c.bf16 %v1169, %v1169
      %v1174 = vpack.c.bf16 %v1170, %v1170
      %v1175 = vpack.c.bf16 %v1171, %v1171
      %v1177 = vsel %vm746, %v1172, 0
      %v1180 = vsel %vm750, %v730, 0
      %1182 = vmatprep.subr.bf16.mxu0 0
      %1183 = vmatpush1.bf16.msra.mxu0 %v1180
      %1184 = vmatprep.subr.bf16.mxu0 0
      %1185 = vmatpush1.bf16.msra.mxu0 0
      %1186 = vmatprep.subr.bf16.mxu0 0
      %1187 = vmatpush1.bf16.msra.mxu0 0
      %1188 = vmatprep.subr.bf16.mxu0 0
      %1189 = vmatpush1.bf16.msra.mxu0 0
      %1190 = vmatprep.subr.bf16.mxu0 0
      %1191 = vmatpush1.bf16.msra.mxu0 0
      %1192 = vmatprep.subr.bf16.mxu0 0
      %1193 = vmatpush1.bf16.msra.mxu0 0
      %1194 = vmatprep.subr.bf16.mxu0 0
      %1195 = vmatpush1.bf16.msra.mxu0 0
      %1196 = vmatprep.subr.bf16.mxu0 0
      %1197 = vmatpush1.bf16.msra.mxu0 0
      %1198 = vmatprep.subr.bf16.mxu0 0
      %1199 = vmatpush1.bf16.msra.mxu0 0
      %1200 = vmatprep.subr.bf16.mxu0 0
      %1201 = vmatpush1.bf16.msra.mxu0 0
      %1202 = vmatprep.subr.bf16.mxu0 0
      %1203 = vmatpush1.bf16.msra.mxu0 0
      %1204 = vmatprep.subr.bf16.mxu0 0
      %1205 = vmatpush1.bf16.msra.mxu0 0
      %1206 = vmatprep.subr.bf16.mxu0 0
      %1207 = vmatpush1.bf16.msra.mxu0 0
      %1208 = vmatprep.subr.bf16.mxu0 0
      %1209 = vmatpush1.bf16.msra.mxu0 0
      %1210 = vmatprep.subr.bf16.mxu0 0
      %1211 = vmatpush1.bf16.msra.mxu0 0
      %1212 = vmatprep.subr.bf16.mxu0 0
      %1213 = vmatpush1.bf16.msra.mxu0 0
      %1214 = vmatprep.mubr.bf16.mxu0 0
      %1215 = vmatmul.mubr.bf16.gmra.mrb[0].mxu0 %v1177
      %v1216 = vpop.f32.mrb[0].mxu0
      %v1217 = vadd.f32 0.0, %v1216
      %v1218 = vpop.f32.mrb[0].mxu0
      %v1219 = vpop.f32.mrb[0].mxu0
      %v1220 = vpop.f32.mrb[0].mxu0
      %1221 = vdwg.mxu0
      %v1223 = vsel %vm746, %v1173, 0
      %v1226 = vsel %vm750, %v731, 0
      %1228 = vmatprep.subr.bf16.mxu0 0
      %1229 = vmatpush1.bf16.msra.mxu0 %v1226
      %1230 = vmatprep.subr.bf16.mxu0 0
      %1231 = vmatpush1.bf16.msra.mxu0 0
      %1232 = vmatprep.subr.bf16.mxu0 0
      %1233 = vmatpush1.bf16.msra.mxu0 0
      %1234 = vmatprep.subr.bf16.mxu0 0
      %1235 = vmatpush1.bf16.msra.mxu0 0
      %1236 = vmatprep.subr.bf16.mxu0 0
      %1237 = vmatpush1.bf16.msra.mxu0 0
      %1238 = vmatprep.subr.bf16.mxu0 0
      %1239 = vmatpush1.bf16.msra.mxu0 0
      %1240 = vmatprep.subr.bf16.mxu0 0
      %1241 = vmatpush1.bf16.msra.mxu0 0
      %1242 = vmatprep.subr.bf16.mxu0 0
      %1243 = vmatpush1.bf16.msra.mxu0 0
      %1244 = vmatprep.subr.bf16.mxu0 0
      %1245 = vmatpush1.bf16.msra.mxu0 0
      %1246 = vmatprep.subr.bf16.mxu0 0
      %1247 = vmatpush1.bf16.msra.mxu0 0
      %1248 = vmatprep.subr.bf16.mxu0 0
      %1249 = vmatpush1.bf16.msra.mxu0 0
      %1250 = vmatprep.subr.bf16.mxu0 0
      %1251 = vmatpush1.bf16.msra.mxu0 0
      %1252 = vmatprep.subr.bf16.mxu0 0
      %1253 = vmatpush1.bf16.msra.mxu0 0
      %1254 = vmatprep.subr.bf16.mxu0 0
      %1255 = vmatpush1.bf16.msra.mxu0 0
      %1256 = vmatprep.subr.bf16.mxu0 0
      %1257 = vmatpush1.bf16.msra.mxu0 0
      %1258 = vmatprep.subr.bf16.mxu0 0
      %1259 = vmatpush1.bf16.msra.mxu0 0
      %1260 = vmatprep.mubr.bf16.mxu0 0
      %1261 = vmatmul.mubr.bf16.gmra.mrb[0].mxu0 %v1223
      %v1262 = vpop.f32.mrb[0].mxu0
      %v1263 = vadd.f32 0.0, %v1262
      %v1264 = vpop.f32.mrb[0].mxu0
      %v1265 = vpop.f32.mrb[0].mxu0
      %v1266 = vpop.f32.mrb[0].mxu0
      %1267 = vdwg.mxu0
      %v1269 = vsel %vm746, %v1174, 0
      %v1272 = vsel %vm750, %v732, 0
      %1274 = vmatprep.subr.bf16.mxu0 0
      %1275 = vmatpush1.bf16.msra.mxu0 %v1272
      %1276 = vmatprep.subr.bf16.mxu0 0
      %1277 = vmatpush1.bf16.msra.mxu0 0
      %1278 = vmatprep.subr.bf16.mxu0 0
      %1279 = vmatpush1.bf16.msra.mxu0 0
      %1280 = vmatprep.subr.bf16.mxu0 0
      %1281 = vmatpush1.bf16.msra.mxu0 0
      %1282 = vmatprep.subr.bf16.mxu0 0
      %1283 = vmatpush1.bf16.msra.mxu0 0
      %1284 = vmatprep.subr.bf16.mxu0 0
      %1285 = vmatpush1.bf16.msra.mxu0 0
      %1286 = vmatprep.subr.bf16.mxu0 0
      %1287 = vmatpush1.bf16.msra.mxu0 0
      %1288 = vmatprep.subr.bf16.mxu0 0
      %1289 = vmatpush1.bf16.msra.mxu0 0
      %1290 = vmatprep.subr.bf16.mxu0 0
      %1291 = vmatpush1.bf16.msra.mxu0 0
      %1292 = vmatprep.subr.bf16.mxu0 0
      %1293 = vmatpush1.bf16.msra.mxu0 0
      %1294 = vmatprep.subr.bf16.mxu0 0
      %1295 = vmatpush1.bf16.msra.mxu0 0
      %1296 = vmatprep.subr.bf16.mxu0 0
      %1297 = vmatpush1.bf16.msra.mxu0 0
      %1298 = vmatprep.subr.bf16.mxu0 0
      %1299 = vmatpush1.bf16.msra.mxu0 0
      %1300 = vmatprep.subr.bf16.mxu0 0
      %1301 = vmatpush1.bf16.msra.mxu0 0
      %1302 = vmatprep.subr.bf16.mxu0 0
      %1303 = vmatpush1.bf16.msra.mxu0 0
      %1304 = vmatprep.subr.bf16.mxu0 0
      %1305 = vmatpush1.bf16.msra.mxu0 0
      %1306 = vmatprep.mubr.bf16.mxu0 0
      %1307 = vmatmul.mubr.bf16.gmra.mrb[0].mxu0 %v1269
      %v1308 = vpop.f32.mrb[0].mxu0
      %v1309 = vadd.f32 0.0, %v1308
      %v1310 = vpop.f32.mrb[0].mxu0
      %v1311 = vpop.f32.mrb[0].mxu0
      %v1312 = vpop.f32.mrb[0].mxu0
      %1313 = vdwg.mxu0
      %v1315 = vsel %vm746, %v1175, 0
      %v1318 = vsel %vm750, %v733, 0
      %1320 = vmatprep.subr.bf16.mxu0 0
      %1321 = vmatpush1.bf16.msra.mxu0 %v1318
      %1322 = vmatprep.subr.bf16.mxu0 0
      %1323 = vmatpush1.bf16.msra.mxu0 0
      %1324 = vmatprep.subr.bf16.mxu0 0
      %1325 = vmatpush1.bf16.msra.mxu0 0
      %1326 = vmatprep.subr.bf16.mxu0 0
      %1327 = vmatpush1.bf16.msra.mxu0 0
      %1328 = vmatprep.subr.bf16.mxu0 0
      %1329 = vmatpush1.bf16.msra.mxu0 0
      %1330 = vmatprep.subr.bf16.mxu0 0
      %1331 = vmatpush1.bf16.msra.mxu0 0
      %1332 = vmatprep.subr.bf16.mxu0 0
      %1333 = vmatpush1.bf16.msra.mxu0 0
      %1334 = vmatprep.subr.bf16.mxu0 0
      %1335 = vmatpush1.bf16.msra.mxu0 0
      %1336 = vmatprep.subr.bf16.mxu0 0
      %1337 = vmatpush1.bf16.msra.mxu0 0
      %1338 = vmatprep.subr.bf16.mxu0 0
      %1339 = vmatpush1.bf16.msra.mxu0 0
      %1340 = vmatprep.subr.bf16.mxu0 0
      %1341 = vmatpush1.bf16.msra.mxu0 0
      %1342 = vmatprep.subr.bf16.mxu0 0
      %1343 = vmatpush1.bf16.msra.mxu0 0
      %1344 = vmatprep.subr.bf16.mxu0 0
      %1345 = vmatpush1.bf16.msra.mxu0 0
      %1346 = vmatprep.subr.bf16.mxu0 0
      %1347 = vmatpush1.bf16.msra.mxu0 0
      %1348 = vmatprep.subr.bf16.mxu0 0
      %1349 = vmatpush1.bf16.msra.mxu0 0
      %1350 = vmatprep.subr.bf16.mxu0 0
      %1351 = vmatpush1.bf16.msra.mxu0 0
      %1352 = vmatprep.mubr.bf16.mxu0 0
      %1353 = vmatmul.mubr.bf16.gmra.mrb[0].mxu0 %v1315
      %v1354 = vpop.f32.mrb[0].mxu0
      %v1355 = vadd.f32 0.0, %v1354
      %v1356 = vpop.f32.mrb[0].mxu0
      %v1357 = vpop.f32.mrb[0].mxu0
      %v1358 = vpop.f32.mrb[0].mxu0
      %1359 = vdwg.mxu0
      %v1360 = vadd.f32 %v1217, %v1263
      %v1361 = vadd.f32 %v1360, %v1309
      %v1362 = vadd.f32 %v1361, %v1355
      %v1363 = vadd.f32 %v442, %v1362
      %1364 = vst [vmem:[#allocation2] sm:$0xff] %v1363
      %v1365 = vpack.c.bf16 %v614, %v614
      %v1366 = vpack.c.bf16 %v646, %v646
      %v1367 = vpack.c.bf16 %v678, %v678
      %v1368 = vpack.c.bf16 %v710, %v710
      %1370 = vrot.lane.b32.xlu0 %v738, 120
      %v1371 = vpop.permute.xlu0 %1370
      %v1373 = vsel %vm746, %v1365, 0
      %v1376 = vsel %vm750, %v1371, 0
      %1378 = vmatprep.subr.bf16.mxu0 0
      %1379 = vmatpush1.bf16.msra.mxu0 %v1376
      %1380 = vmatprep.subr.bf16.mxu0 0
      %1381 = vmatpush1.bf16.msra.mxu0 0
      %1382 = vmatprep.subr.bf16.mxu0 0
      %1383 = vmatpush1.bf16.msra.mxu0 0
      %1384 = vmatprep.subr.bf16.mxu0 0
      %1385 = vmatpush1.bf16.msra.mxu0 0
      %1386 = vmatprep.subr.bf16.mxu0 0
      %1387 = vmatpush1.bf16.msra.mxu0 0
      %1388 = vmatprep.subr.bf16.mxu0 0
      %1389 = vmatpush1.bf16.msra.mxu0 0
      %1390 = vmatprep.subr.bf16.mxu0 0
      %1391 = vmatpush1.bf16.msra.mxu0 0
      %1392 = vmatprep.subr.bf16.mxu0 0
      %1393 = vmatpush1.bf16.msra.mxu0 0
      %1394 = vmatprep.subr.bf16.mxu0 0
      %1395 = vmatpush1.bf16.msra.mxu0 0
      %1396 = vmatprep.subr.bf16.mxu0 0
      %1397 = vmatpush1.bf16.msra.mxu0 0
      %1398 = vmatprep.subr.bf16.mxu0 0
      %1399 = vmatpush1.bf16.msra.mxu0 0
      %1400 = vmatprep.subr.bf16.mxu0 0
      %1401 = vmatpush1.bf16.msra.mxu0 0
      %1402 = vmatprep.subr.bf16.mxu0 0
      %1403 = vmatpush1.bf16.msra.mxu0 0
      %1404 = vmatprep.subr.bf16.mxu0 0
      %1405 = vmatpush1.bf16.msra.mxu0 0
      %1406 = vmatprep.subr.bf16.mxu0 0
      %1407 = vmatpush1.bf16.msra.mxu0 0
      %1408 = vmatprep.subr.bf16.mxu0 0
      %1409 = vmatpush1.bf16.msra.mxu0 0
      %1410 = vmatprep.mubr.bf16.mxu0 0
      %1411 = vmatmul.mubr.bf16.gmra.mrb[0].mxu0 %v1373
      %v1412 = vpop.f32.mrb[0].mxu0
      %v1413 = vadd.f32 %v725, %v1412
      %v1414 = vpop.f32.mrb[0].mxu0
      %v1415 = vpop.f32.mrb[0].mxu0
      %v1416 = vpop.f32.mrb[0].mxu0
      %1417 = vdwg.mxu0
      %1419 = vrot.lane.b32.xlu0 %v739, 120
      %v1420 = vpop.permute.xlu0 %1419
      %v1422 = vsel %vm746, %v1366, 0
      %v1425 = vsel %vm750, %v1420, 0
      %1427 = vmatprep.subr.bf16.mxu0 0
      %1428 = vmatpush1.bf16.msra.mxu0 %v1425
      %1429 = vmatprep.subr.bf16.mxu0 0
      %1430 = vmatpush1.bf16.msra.mxu0 0
      %1431 = vmatprep.subr.bf16.mxu0 0
      %1432 = vmatpush1.bf16.msra.mxu0 0
      %1433 = vmatprep.subr.bf16.mxu0 0
      %1434 = vmatpush1.bf16.msra.mxu0 0
      %1435 = vmatprep.subr.bf16.mxu0 0
      %1436 = vmatpush1.bf16.msra.mxu0 0
      %1437 = vmatprep.subr.bf16.mxu0 0
      %1438 = vmatpush1.bf16.msra.mxu0 0
      %1439 = vmatprep.subr.bf16.mxu0 0
      %1440 = vmatpush1.bf16.msra.mxu0 0
      %1441 = vmatprep.subr.bf16.mxu0 0
      %1442 = vmatpush1.bf16.msra.mxu0 0
      %1443 = vmatprep.subr.bf16.mxu0 0
      %1444 = vmatpush1.bf16.msra.mxu0 0
      %1445 = vmatprep.subr.bf16.mxu0 0
      %1446 = vmatpush1.bf16.msra.mxu0 0
      %1447 = vmatprep.subr.bf16.mxu0 0
      %1448 = vmatpush1.bf16.msra.mxu0 0
      %1449 = vmatprep.subr.bf16.mxu0 0
      %1450 = vmatpush1.bf16.msra.mxu0 0
      %1451 = vmatprep.subr.bf16.mxu0 0
      %1452 = vmatpush1.bf16.msra.mxu0 0
      %1453 = vmatprep.subr.bf16.mxu0 0
      %1454 = vmatpush1.bf16.msra.mxu0 0
      %1455 = vmatprep.subr.bf16.mxu0 0
      %1456 = vmatpush1.bf16.msra.mxu0 0
      %1457 = vmatprep.subr.bf16.mxu0 0
      %1458 = vmatpush1.bf16.msra.mxu0 0
      %1459 = vmatprep.mubr.bf16.mxu0 0
      %1460 = vmatmul.mubr.bf16.gmra.mrb[0].mxu0 %v1422
      %v1461 = vpop.f32.mrb[0].mxu0
      %v1462 = vadd.f32 %v726, %v1461
      %v1463 = vpop.f32.mrb[0].mxu0
      %v1464 = vpop.f32.mrb[0].mxu0
      %v1465 = vpop.f32.mrb[0].mxu0
      %1466 = vdwg.mxu0
      %1468 = vrot.lane.b32.xlu0 %v740, 120
      %v1469 = vpop.permute.xlu0 %1468
      %v1471 = vsel %vm746, %v1367, 0
      %v1474 = vsel %vm750, %v1469, 0
      %1476 = vmatprep.subr.bf16.mxu0 0
      %1477 = vmatpush1.bf16.msra.mxu0 %v1474
      %1478 = vmatprep.subr.bf16.mxu0 0
      %1479 = vmatpush1.bf16.msra.mxu0 0
      %1480 = vmatprep.subr.bf16.mxu0 0
      %1481 = vmatpush1.bf16.msra.mxu0 0
      %1482 = vmatprep.subr.bf16.mxu0 0
      %1483 = vmatpush1.bf16.msra.mxu0 0
      %1484 = vmatprep.subr.bf16.mxu0 0
      %1485 = vmatpush1.bf16.msra.mxu0 0
      %1486 = vmatprep.subr.bf16.mxu0 0
      %1487 = vmatpush1.bf16.msra.mxu0 0
      %1488 = vmatprep.subr.bf16.mxu0 0
      %1489 = vmatpush1.bf16.msra.mxu0 0
      %1490 = vmatprep.subr.bf16.mxu0 0
      %1491 = vmatpush1.bf16.msra.mxu0 0
      %1492 = vmatprep.subr.bf16.mxu0 0
      %1493 = vmatpush1.bf16.msra.mxu0 0
      %1494 = vmatprep.subr.bf16.mxu0 0
      %1495 = vmatpush1.bf16.msra.mxu0 0
      %1496 = vmatprep.subr.bf16.mxu0 0
      %1497 = vmatpush1.bf16.msra.mxu0 0
      %1498 = vmatprep.subr.bf16.mxu0 0
      %1499 = vmatpush1.bf16.msra.mxu0 0
      %1500 = vmatprep.subr.bf16.mxu0 0
      %1501 = vmatpush1.bf16.msra.mxu0 0
      %1502 = vmatprep.subr.bf16.mxu0 0
      %1503 = vmatpush1.bf16.msra.mxu0 0
      %1504 = vmatprep.subr.bf16.mxu0 0
      %1505 = vmatpush1.bf16.msra.mxu0 0
      %1506 = vmatprep.subr.bf16.mxu0 0
      %1507 = vmatpush1.bf16.msra.mxu0 0
      %1508 = vmatprep.mubr.bf16.mxu0 0
      %1509 = vmatmul.mubr.bf16.gmra.mrb[0].mxu0 %v1471
      %v1510 = vpop.f32.mrb[0].mxu0
      %v1511 = vadd.f32 %v727, %v1510
      %v1512 = vpop.f32.mrb[0].mxu0
      %v1513 = vpop.f32.mrb[0].mxu0
      %v1514 = vpop.f32.mrb[0].mxu0
      %1515 = vdwg.mxu0
      %1517 = vrot.lane.b32.xlu0 %v741, 120
      %v1518 = vpop.permute.xlu0 %1517
      %v1520 = vsel %vm746, %v1368, 0
      %v1523 = vsel %vm750, %v1518, 0
      %1525 = vmatprep.subr.bf16.mxu0 0
      %1526 = vmatpush1.bf16.msra.mxu0 %v1523
      %1527 = vmatprep.subr.bf16.mxu0 0
      %1528 = vmatpush1.bf16.msra.mxu0 0
      %1529 = vmatprep.subr.bf16.mxu0 0
      %1530 = vmatpush1.bf16.msra.mxu0 0
      %1531 = vmatprep.subr.bf16.mxu0 0
      %1532 = vmatpush1.bf16.msra.mxu0 0
      %1533 = vmatprep.subr.bf16.mxu0 0
      %1534 = vmatpush1.bf16.msra.mxu0 0
      %1535 = vmatprep.subr.bf16.mxu0 0
      %1536 = vmatpush1.bf16.msra.mxu0 0
      %1537 = vmatprep.subr.bf16.mxu0 0
      %1538 = vmatpush1.bf16.msra.mxu0 0
      %1539 = vmatprep.subr.bf16.mxu0 0
      %1540 = vmatpush1.bf16.msra.mxu0 0
      %1541 = vmatprep.subr.bf16.mxu0 0
      %1542 = vmatpush1.bf16.msra.mxu0 0
      %1543 = vmatprep.subr.bf16.mxu0 0
      %1544 = vmatpush1.bf16.msra.mxu0 0
      %1545 = vmatprep.subr.bf16.mxu0 0
      %1546 = vmatpush1.bf16.msra.mxu0 0
      %1547 = vmatprep.subr.bf16.mxu0 0
      %1548 = vmatpush1.bf16.msra.mxu0 0
      %1549 = vmatprep.subr.bf16.mxu0 0
      %1550 = vmatpush1.bf16.msra.mxu0 0
      %1551 = vmatprep.subr.bf16.mxu0 0
      %1552 = vmatpush1.bf16.msra.mxu0 0
      %1553 = vmatprep.subr.bf16.mxu0 0
      %1554 = vmatpush1.bf16.msra.mxu0 0
      %1555 = vmatprep.subr.bf16.mxu0 0
      %1556 = vmatpush1.bf16.msra.mxu0 0
      %1557 = vmatprep.mubr.bf16.mxu0 0
      %1558 = vmatmul.mubr.bf16.gmra.mrb[0].mxu0 %v1520
      %v1559 = vpop.f32.mrb[0].mxu0
      %v1560 = vadd.f32 %v728, %v1559
      %v1561 = vpop.f32.mrb[0].mxu0
      %v1562 = vpop.f32.mrb[0].mxu0
      %v1563 = vpop.f32.mrb[0].mxu0
      %1564 = vdwg.mxu0
      %v1565 = vlaneseq
      %v1566 = vshrl.u32 %v1565, 7
      %v1567 = vsub.s32 1, %v1566
      %v1568 = vrot.slane %v729, %v1567
      %v1569 = vadd.f32 %v1413, %v1568
      %v1570 = vadd.f32 %v1462, %v1568
      %v1571 = vadd.f32 %v1511, %v1568
      %v1572 = vadd.f32 %v1560, %v1568
      %v1573 = vsel %vm746, %v1569, -inf
      %1574 = vmax.xlane.f32.xlu0 %v1573
      %v1575 = vpop.xlane.xlu0 %1574
      %v1576 = vsel %vm746, %v1570, -inf
      %1577 = vmax.xlane.f32.xlu0 %v1576
      %v1578 = vpop.xlane.xlu0 %1577
      %v1579 = vsel %vm746, %v1571, -inf
      %1580 = vmax.xlane.f32.xlu0 %v1579
      %v1581 = vpop.xlane.xlu0 %1580
      %v1582 = vsel %vm746, %v1572, -inf
      %1583 = vmax.xlane.f32.xlu0 %v1582
      %v1584 = vpop.xlane.xlu0 %1583
      %v1585 = vsub.f32 %v1569, %v1575
      %v1586 = vsub.f32 %v1570, %v1578
      %v1587 = vsub.f32 %v1571, %v1581
      %v1588 = vsub.f32 %v1572, %v1584
      %v1589 = vmul.f32 %v1585, 1.442695
      %v1590 = vpow.pop %v1589
      %v1591 = vmul.f32 %v1586, 1.442695
      %v1592 = vpow.pop %v1591
      %v1593 = vmul.f32 %v1587, 1.442695
      %v1594 = vpow.pop %v1593
      %v1595 = vmul.f32 %v1588, 1.442695
      %v1596 = vpow.pop %v1595
      %v1597 = vsel %vm746, %v1590, 0.0
      %1598 = vadd.xlane.f32.xlu0 %v1597
      %v1599 = vpop.xlane.xlu0 %1598
      %v1600 = vsel %vm746, %v1592, 0.0
      %1601 = vadd.xlane.f32.xlu0 %v1600
      %v1602 = vpop.xlane.xlu0 %1601
      %v1603 = vsel %vm746, %v1594, 0.0
      %1604 = vadd.xlane.f32.xlu0 %v1603
      %v1605 = vpop.xlane.xlu0 %1604
      %v1606 = vsel %vm746, %v1596, 0.0
      %1607 = vadd.xlane.f32.xlu0 %v1606
      %v1608 = vpop.xlane.xlu0 %1607
      %v1609 = vpack.c.bf16 %v1590, %v1590
      %v1610 = vpack.c.bf16 %v1592, %v1592
      %v1611 = vpack.c.bf16 %v1594, %v1594
      %v1612 = vpack.c.bf16 %v1596, %v1596
      %1614 = vrot.lane.b32.xlu0 %v742, 120
      %v1615 = vpop.permute.xlu0 %1614
      %v1617 = vsel %vm746, %v1609, 0
      %v1620 = vsel %vm746, %v1615, 0
      %1622 = vmatprep.subr.bf16.mxu0 0
      %1623 = vmatpush1.bf16.xpose.msra.mxu0 %v1620
      %1624 = vmatprep.subr.bf16.mxu0 0
      %1625 = vmatpush1.bf16.xpose.msra.mxu0 0
      %1626 = vmatprep.subr.bf16.mxu0 0
      %1627 = vmatpush1.bf16.xpose.msra.mxu0 0
      %1628 = vmatprep.subr.bf16.mxu0 0
      %1629 = vmatpush1.bf16.xpose.msra.mxu0 0
      %1630 = vmatprep.subr.bf16.mxu0 0
      %1631 = vmatpush1.bf16.xpose.msra.mxu0 0
      %1632 = vmatprep.subr.bf16.mxu0 0
      %1633 = vmatpush1.bf16.xpose.msra.mxu0 0
      %1634 = vmatprep.subr.bf16.mxu0 0
      %1635 = vmatpush1.bf16.xpose.msra.mxu0 0
      %1636 = vmatprep.subr.bf16.mxu0 0
      %1637 = vmatpush1.bf16.xpose.msra.mxu0 0
      %1638 = vmatprep.subr.bf16.mxu0 0
      %1639 = vmatpush1.bf16.xpose.msra.mxu0 0
      %1640 = vmatprep.subr.bf16.mxu0 0
      %1641 = vmatpush1.bf16.xpose.msra.mxu0 0
      %1642 = vmatprep.subr.bf16.mxu0 0
      %1643 = vmatpush1.bf16.xpose.msra.mxu0 0
      %1644 = vmatprep.subr.bf16.mxu0 0
      %1645 = vmatpush1.bf16.xpose.msra.mxu0 0
      %1646 = vmatprep.subr.bf16.mxu0 0
      %1647 = vmatpush1.bf16.xpose.msra.mxu0 0
      %1648 = vmatprep.subr.bf16.mxu0 0
      %1649 = vmatpush1.bf16.xpose.msra.mxu0 0
      %1650 = vmatprep.subr.bf16.mxu0 0
      %1651 = vmatpush1.bf16.xpose.msra.mxu0 0
      %1652 = vmatprep.subr.bf16.mxu0 0
      %1653 = vmatpush1.bf16.xpose.msra.mxu0 0
      %1654 = vmatprep.mubr.bf16.mxu0 0
      %1655 = vmatmul.mubr.bf16.gmra.mrb[0].mxu0 %v1617
      %v1656 = vpop.f32.mrb[0].mxu0
      %v1657 = vadd.f32 0.0, %v1656
      %v1658 = vpop.f32.mrb[0].mxu0
      %v1659 = vpop.f32.mrb[0].mxu0
      %v1660 = vpop.f32.mrb[0].mxu0
      %1661 = vdwg.mxu0
      %1663 = vrot.lane.b32.xlu0 %v743, 120
      %v1664 = vpop.permute.xlu0 %1663
      %v1666 = vsel %vm746, %v1610, 0
      %v1669 = vsel %vm746, %v1664, 0
      %1671 = vmatprep.subr.bf16.mxu0 0
      %1672 = vmatpush1.bf16.xpose.msra.mxu0 %v1669
      %1673 = vmatprep.subr.bf16.mxu0 0
      %1674 = vmatpush1.bf16.xpose.msra.mxu0 0
      %1675 = vmatprep.subr.bf16.mxu0 0
      %1676 = vmatpush1.bf16.xpose.msra.mxu0 0
      %1677 = vmatprep.subr.bf16.mxu0 0
      %1678 = vmatpush1.bf16.xpose.msra.mxu0 0
      %1679 = vmatprep.subr.bf16.mxu0 0
      %1680 = vmatpush1.bf16.xpose.msra.mxu0 0
      %1681 = vmatprep.subr.bf16.mxu0 0
      %1682 = vmatpush1.bf16.xpose.msra.mxu0 0
      %1683 = vmatprep.subr.bf16.mxu0 0
      %1684 = vmatpush1.bf16.xpose.msra.mxu0 0
      %1685 = vmatprep.subr.bf16.mxu0 0
      %1686 = vmatpush1.bf16.xpose.msra.mxu0 0
      %1687 = vmatprep.subr.bf16.mxu0 0
      %1688 = vmatpush1.bf16.xpose.msra.mxu0 0
      %1689 = vmatprep.subr.bf16.mxu0 0
      %1690 = vmatpush1.bf16.xpose.msra.mxu0 0
      %1691 = vmatprep.subr.bf16.mxu0 0
      %1692 = vmatpush1.bf16.xpose.msra.mxu0 0
      %1693 = vmatprep.subr.bf16.mxu0 0
      %1694 = vmatpush1.bf16.xpose.msra.mxu0 0
      %1695 = vmatprep.subr.bf16.mxu0 0
      %1696 = vmatpush1.bf16.xpose.msra.mxu0 0
      %1697 = vmatprep.subr.bf16.mxu0 0
      %1698 = vmatpush1.bf16.xpose.msra.mxu0 0
      %1699 = vmatprep.subr.bf16.mxu0 0
      %1700 = vmatpush1.bf16.xpose.msra.mxu0 0
      %1701 = vmatprep.subr.bf16.mxu0 0
      %1702 = vmatpush1.bf16.xpose.msra.mxu0 0
      %1703 = vmatprep.mubr.bf16.mxu0 0
      %1704 = vmatmul.mubr.bf16.gmra.mrb[0].mxu0 %v1666
      %v1705 = vpop.f32.mrb[0].mxu0
      %v1706 = vadd.f32 0.0, %v1705
      %v1707 = vpop.f32.mrb[0].mxu0
      %v1708 = vpop.f32.mrb[0].mxu0
      %v1709 = vpop.f32.mrb[0].mxu0
      %1710 = vdwg.mxu0
      %1712 = vrot.lane.b32.xlu0 %v744, 120
      %v1713 = vpop.permute.xlu0 %1712
      %v1715 = vsel %vm746, %v1611, 0
      %v1718 = vsel %vm746, %v1713, 0
      %1720 = vmatprep.subr.bf16.mxu0 0
      %1721 = vmatpush1.bf16.xpose.msra.mxu0 %v1718
      %1722 = vmatprep.subr.bf16.mxu0 0
      %1723 = vmatpush1.bf16.xpose.msra.mxu0 0
      %1724 = vmatprep.subr.bf16.mxu0 0
      %1725 = vmatpush1.bf16.xpose.msra.mxu0 0
      %1726 = vmatprep.subr.bf16.mxu0 0
      %1727 = vmatpush1.bf16.xpose.msra.mxu0 0
      %1728 = vmatprep.subr.bf16.mxu0 0
      %1729 = vmatpush1.bf16.xpose.msra.mxu0 0
      %1730 = vmatprep.subr.bf16.mxu0 0
      %1731 = vmatpush1.bf16.xpose.msra.mxu0 0
      %1732 = vmatprep.subr.bf16.mxu0 0
      %1733 = vmatpush1.bf16.xpose.msra.mxu0 0
      %1734 = vmatprep.subr.bf16.mxu0 0
      %1735 = vmatpush1.bf16.xpose.msra.mxu0 0
      %1736 = vmatprep.subr.bf16.mxu0 0
      %1737 = vmatpush1.bf16.xpose.msra.mxu0 0
      %1738 = vmatprep.subr.bf16.mxu0 0
      %1739 = vmatpush1.bf16.xpose.msra.mxu0 0
      %1740 = vmatprep.subr.bf16.mxu0 0
      %1741 = vmatpush1.bf16.xpose.msra.mxu0 0
      %1742 = vmatprep.subr.bf16.mxu0 0
      %1743 = vmatpush1.bf16.xpose.msra.mxu0 0
      %1744 = vmatprep.subr.bf16.mxu0 0
      %1745 = vmatpush1.bf16.xpose.msra.mxu0 0
      %1746 = vmatprep.subr.bf16.mxu0 0
      %1747 = vmatpush1.bf16.xpose.msra.mxu0 0
      %1748 = vmatprep.subr.bf16.mxu0 0
      %1749 = vmatpush1.bf16.xpose.msra.mxu0 0
      %1750 = vmatprep.subr.bf16.mxu0 0
      %1751 = vmatpush1.bf16.xpose.msra.mxu0 0
      %1752 = vmatprep.mubr.bf16.mxu0 0
      %1753 = vmatmul.mubr.bf16.gmra.mrb[0].mxu0 %v1715
      %v1754 = vpop.f32.mrb[0].mxu0
      %v1755 = vadd.f32 0.0, %v1754
      %v1756 = vpop.f32.mrb[0].mxu0
      %v1757 = vpop.f32.mrb[0].mxu0
      %v1758 = vpop.f32.mrb[0].mxu0
      %1759 = vdwg.mxu0
      %1761 = vrot.lane.b32.xlu0 %v745, 120
      %v1762 = vpop.permute.xlu0 %1761
      %v1764 = vsel %vm746, %v1612, 0
      %v1767 = vsel %vm746, %v1762, 0
      %1769 = vmatprep.subr.bf16.mxu0 0
      %1770 = vmatpush1.bf16.xpose.msra.mxu0 %v1767
      %1771 = vmatprep.subr.bf16.mxu0 0
      %1772 = vmatpush1.bf16.xpose.msra.mxu0 0
      %1773 = vmatprep.subr.bf16.mxu0 0
      %1774 = vmatpush1.bf16.xpose.msra.mxu0 0
      %1775 = vmatprep.subr.bf16.mxu0 0
      %1776 = vmatpush1.bf16.xpose.msra.mxu0 0
      %1777 = vmatprep.subr.bf16.mxu0 0
      %1778 = vmatpush1.bf16.xpose.msra.mxu0 0
      %1779 = vmatprep.subr.bf16.mxu0 0
      %1780 = vmatpush1.bf16.xpose.msra.mxu0 0
      %1781 = vmatprep.subr.bf16.mxu0 0
      %1782 = vmatpush1.bf16.xpose.msra.mxu0 0
      %1783 = vmatprep.subr.bf16.mxu0 0
      %1784 = vmatpush1.bf16.xpose.msra.mxu0 0
      %1785 = vmatprep.subr.bf16.mxu0 0
      %1786 = vmatpush1.bf16.xpose.msra.mxu0 0
      %1787 = vmatprep.subr.bf16.mxu0 0
      %1788 = vmatpush1.bf16.xpose.msra.mxu0 0
      %1789 = vmatprep.subr.bf16.mxu0 0
      %1790 = vmatpush1.bf16.xpose.msra.mxu0 0
      %1791 = vmatprep.subr.bf16.mxu0 0
      %1792 = vmatpush1.bf16.xpose.msra.mxu0 0
      %1793 = vmatprep.subr.bf16.mxu0 0
      %1794 = vmatpush1.bf16.xpose.msra.mxu0 0
      %1795 = vmatprep.subr.bf16.mxu0 0
      %1796 = vmatpush1.bf16.xpose.msra.mxu0 0
      %1797 = vmatprep.subr.bf16.mxu0 0
      %1798 = vmatpush1.bf16.xpose.msra.mxu0 0
      %1799 = vmatprep.subr.bf16.mxu0 0
      %1800 = vmatpush1.bf16.xpose.msra.mxu0 0
      %1801 = vmatprep.mubr.bf16.mxu0 0
      %1802 = vmatmul.mubr.bf16.gmra.mrb[0].mxu0 %v1764
      %v1803 = vpop.f32.mrb[0].mxu0
      %v1804 = vadd.f32 0.0, %v1803
      %v1805 = vpop.f32.mrb[0].mxu0
      %v1806 = vpop.f32.mrb[0].mxu0
      %v1807 = vpop.f32.mrb[0].mxu0
      %1808 = vdwg.mxu0
      %v1809 = vrcp.pop %v1599
      %v1810 = vrcp.pop %v1602
      %v1811 = vrcp.pop %v1605
      %v1812 = vrcp.pop %v1608
      %v1813 = vmul.f32 %v1657, %v1809
      %v1814 = vmul.f32 %v1706, %v1810
      %v1815 = vmul.f32 %v1755, %v1811
      %v1816 = vmul.f32 %v1804, %v1812
      %v1817 = vpack.c.bf16 %v1813, %v1813
      %v1818 = vpack.c.bf16 %v1814, %v1814
      %v1819 = vpack.c.bf16 %v1815, %v1815
      %v1820 = vpack.c.bf16 %v1816, %v1816
      %v1822 = vsel %vm746, %v1817, 0
      %1824 = vmatprep.subr.bf16.mxu0 0
      %1825 = vmatpush1.bf16.msra.mxu0 %v1180
      %1826 = vmatprep.subr.bf16.mxu0 0
      %1827 = vmatpush1.bf16.msra.mxu0 0
      %1828 = vmatprep.subr.bf16.mxu0 0
      %1829 = vmatpush1.bf16.msra.mxu0 0
      %1830 = vmatprep.subr.bf16.mxu0 0
      %1831 = vmatpush1.bf16.msra.mxu0 0
      %1832 = vmatprep.subr.bf16.mxu0 0
      %1833 = vmatpush1.bf16.msra.mxu0 0
      %1834 = vmatprep.subr.bf16.mxu0 0
      %1835 = vmatpush1.bf16.msra.mxu0 0
      %1836 = vmatprep.subr.bf16.mxu0 0
      %1837 = vmatpush1.bf16.msra.mxu0 0
      %1838 = vmatprep.subr.bf16.mxu0 0
      %1839 = vmatpush1.bf16.msra.mxu0 0
      %1840 = vmatprep.subr.bf16.mxu0 0
      %1841 = vmatpush1.bf16.msra.mxu0 0
      %1842 = vmatprep.subr.bf16.mxu0 0
      %1843 = vmatpush1.bf16.msra.mxu0 0
      %1844 = vmatprep.subr.bf16.mxu0 0
      %1845 = vmatpush1.bf16.msra.mxu0 0
      %1846 = vmatprep.subr.bf16.mxu0 0
      %1847 = vmatpush1.bf16.msra.mxu0 0
      %1848 = vmatprep.subr.bf16.mxu0 0
      %1849 = vmatpush1.bf16.msra.mxu0 0
      %1850 = vmatprep.subr.bf16.mxu0 0
      %1851 = vmatpush1.bf16.msra.mxu0 0
      %1852 = vmatprep.subr.bf16.mxu0 0
      %1853 = vmatpush1.bf16.msra.mxu0 0
      %1854 = vmatprep.subr.bf16.mxu0 0
      %1855 = vmatpush1.bf16.msra.mxu0 0
      %1856 = vmatprep.mubr.bf16.mxu0 0
      %1857 = vmatmul.mubr.bf16.gmra.mrb[0].mxu0 %v1822
      %v1858 = vpop.f32.mrb[0].mxu0
      %v1859 = vadd.f32 0.0, %v1858
      %v1860 = vpop.f32.mrb[0].mxu0
      %v1861 = vpop.f32.mrb[0].mxu0
      %v1862 = vpop.f32.mrb[0].mxu0
      %1863 = vdwg.mxu0
      %v1865 = vsel %vm746, %v1818, 0
      %1867 = vmatprep.subr.bf16.mxu0 0
      %1868 = vmatpush1.bf16.msra.mxu0 %v1226
      %1869 = vmatprep.subr.bf16.mxu0 0
      %1870 = vmatpush1.bf16.msra.mxu0 0
      %1871 = vmatprep.subr.bf16.mxu0 0
      %1872 = vmatpush1.bf16.msra.mxu0 0
      %1873 = vmatprep.subr.bf16.mxu0 0
      %1874 = vmatpush1.bf16.msra.mxu0 0
      %1875 = vmatprep.subr.bf16.mxu0 0
      %1876 = vmatpush1.bf16.msra.mxu0 0
      %1877 = vmatprep.subr.bf16.mxu0 0
      %1878 = vmatpush1.bf16.msra.mxu0 0
      %1879 = vmatprep.subr.bf16.mxu0 0
      %1880 = vmatpush1.bf16.msra.mxu0 0
      %1881 = vmatprep.subr.bf16.mxu0 0
      %1882 = vmatpush1.bf16.msra.mxu0 0
      %1883 = vmatprep.subr.bf16.mxu0 0
      %1884 = vmatpush1.bf16.msra.mxu0 0
      %1885 = vmatprep.subr.bf16.mxu0 0
      %1886 = vmatpush1.bf16.msra.mxu0 0
      %1887 = vmatprep.subr.bf16.mxu0 0
      %1888 = vmatpush1.bf16.msra.mxu0 0
      %1889 = vmatprep.subr.bf16.mxu0 0
      %1890 = vmatpush1.bf16.msra.mxu0 0
      %1891 = vmatprep.subr.bf16.mxu0 0
      %1892 = vmatpush1.bf16.msra.mxu0 0
      %1893 = vmatprep.subr.bf16.mxu0 0
      %1894 = vmatpush1.bf16.msra.mxu0 0
      %1895 = vmatprep.subr.bf16.mxu0 0
      %1896 = vmatpush1.bf16.msra.mxu0 0
      %1897 = vmatprep.subr.bf16.mxu0 0
      %1898 = vmatpush1.bf16.msra.mxu0 0
      %1899 = vmatprep.mubr.bf16.mxu0 0
      %1900 = vmatmul.mubr.bf16.gmra.mrb[0].mxu0 %v1865
      %v1901 = vpop.f32.mrb[0].mxu0
      %v1902 = vadd.f32 0.0, %v1901
      %v1903 = vpop.f32.mrb[0].mxu0
      %v1904 = vpop.f32.mrb[0].mxu0
      %v1905 = vpop.f32.mrb[0].mxu0
      %1906 = vdwg.mxu0
      %v1908 = vsel %vm746, %v1819, 0
      %1910 = vmatprep.subr.bf16.mxu0 0
      %1911 = vmatpush1.bf16.msra.mxu0 %v1272
      %1912 = vmatprep.subr.bf16.mxu0 0
      %1913 = vmatpush1.bf16.msra.mxu0 0
      %1914 = vmatprep.subr.bf16.mxu0 0
      %1915 = vmatpush1.bf16.msra.mxu0 0
      %1916 = vmatprep.subr.bf16.mxu0 0
      %1917 = vmatpush1.bf16.msra.mxu0 0
      %1918 = vmatprep.subr.bf16.mxu0 0
      %1919 = vmatpush1.bf16.msra.mxu0 0
      %1920 = vmatprep.subr.bf16.mxu0 0
      %1921 = vmatpush1.bf16.msra.mxu0 0
      %1922 = vmatprep.subr.bf16.mxu0 0
      %1923 = vmatpush1.bf16.msra.mxu0 0
      %1924 = vmatprep.subr.bf16.mxu0 0
      %1925 = vmatpush1.bf16.msra.mxu0 0
      %1926 = vmatprep.subr.bf16.mxu0 0
      %1927 = vmatpush1.bf16.msra.mxu0 0
      %1928 = vmatprep.subr.bf16.mxu0 0
      %1929 = vmatpush1.bf16.msra.mxu0 0
      %1930 = vmatprep.subr.bf16.mxu0 0
      %1931 = vmatpush1.bf16.msra.mxu0 0
      %1932 = vmatprep.subr.bf16.mxu0 0
      %1933 = vmatpush1.bf16.msra.mxu0 0
      %1934 = vmatprep.subr.bf16.mxu0 0
      %1935 = vmatpush1.bf16.msra.mxu0 0
      %1936 = vmatprep.subr.bf16.mxu0 0
      %1937 = vmatpush1.bf16.msra.mxu0 0
      %1938 = vmatprep.subr.bf16.mxu0 0
      %1939 = vmatpush1.bf16.msra.mxu0 0
      %1940 = vmatprep.subr.bf16.mxu0 0
      %1941 = vmatpush1.bf16.msra.mxu0 0
      %1942 = vmatprep.mubr.bf16.mxu0 0
      %1943 = vmatmul.mubr.bf16.gmra.mrb[0].mxu0 %v1908
      %v1944 = vpop.f32.mrb[0].mxu0
      %v1945 = vadd.f32 0.0, %v1944
      %v1946 = vpop.f32.mrb[0].mxu0
      %v1947 = vpop.f32.mrb[0].mxu0
      %v1948 = vpop.f32.mrb[0].mxu0
      %1949 = vdwg.mxu0
      %v1951 = vsel %vm746, %v1820, 0
      %1953 = vmatprep.subr.bf16.mxu0 0
      %1954 = vmatpush1.bf16.msra.mxu0 %v1318
      %1955 = vmatprep.subr.bf16.mxu0 0
      %1956 = vmatpush1.bf16.msra.mxu0 0
      %1957 = vmatprep.subr.bf16.mxu0 0
      %1958 = vmatpush1.bf16.msra.mxu0 0
      %1959 = vmatprep.subr.bf16.mxu0 0
      %1960 = vmatpush1.bf16.msra.mxu0 0
      %1961 = vmatprep.subr.bf16.mxu0 0
      %1962 = vmatpush1.bf16.msra.mxu0 0
      %1963 = vmatprep.subr.bf16.mxu0 0
      %1964 = vmatpush1.bf16.msra.mxu0 0
      %1965 = vmatprep.subr.bf16.mxu0 0
      %1966 = vmatpush1.bf16.msra.mxu0 0
      %1967 = vmatprep.subr.bf16.mxu0 0
      %1968 = vmatpush1.bf16.msra.mxu0 0
      %1969 = vmatprep.subr.bf16.mxu0 0
      %1970 = vmatpush1.bf16.msra.mxu0 0
      %1971 = vmatprep.subr.bf16.mxu0 0
      %1972 = vmatpush1.bf16.msra.mxu0 0
      %1973 = vmatprep.subr.bf16.mxu0 0
      %1974 = vmatpush1.bf16.msra.mxu0 0
      %1975 = vmatprep.subr.bf16.mxu0 0
      %1976 = vmatpush1.bf16.msra.mxu0 0
      %1977 = vmatprep.subr.bf16.mxu0 0
      %1978 = vmatpush1.bf16.msra.mxu0 0
      %1979 = vmatprep.subr.bf16.mxu0 0
      %1980 = vmatpush1.bf16.msra.mxu0 0
      %1981 = vmatprep.subr.bf16.mxu0 0
      %1982 = vmatpush1.bf16.msra.mxu0 0
      %1983 = vmatprep.subr.bf16.mxu0 0
      %1984 = vmatpush1.bf16.msra.mxu0 0
      %1985 = vmatprep.mubr.bf16.mxu0 0
      %1986 = vmatmul.mubr.bf16.gmra.mrb[0].mxu0 %v1951
      %v1987 = vpop.f32.mrb[0].mxu0
      %v1988 = vadd.f32 0.0, %v1987
      %v1989 = vpop.f32.mrb[0].mxu0
      %v1990 = vpop.f32.mrb[0].mxu0
      %v1991 = vpop.f32.mrb[0].mxu0
      %1992 = vdwg.mxu0
      %v1993 = vadd.f32 %v1859, %v1902
      %v1994 = vadd.f32 %v1993, %v1945
      %v1995 = vadd.f32 %v1994, %v1988
      %v1996 = vadd.f32 %v443, %v1995
      %1997 = vst [vmem:[#allocation2 + $0x8] sm:$0xff] %v1996
      %v1998 = vld [vmem:[#allocation2] sm:$0xff]
      %v1999 = vld [vmem:[#allocation2 + $0x8] sm:$0xff]
      %v2000 = vld [vmem:[%s422] sm:$0x1]
      %v2001 = vmul.f32 %v1998, %v1998
      %v2002 = vmul.f32 %v1999, %v1999
      %2003 = vadd.xlane.f32.xlu0 %v2001
      %v2004 = vpop.xlane.xlu0 %2003
      %2005 = vadd.xlane.f32.xlu0 %v2002
      %v2006 = vpop.xlane.xlu0 %2005
      %v2007 = vmul.f32 %v2004, 0.03125
      %v2008 = vmul.f32 %v2006, 0.03125
      %v2009 = vadd.f32 %v2007, 1e-06
      %v2010 = vadd.f32 %v2008, 1e-06
      %v2011 = vrsqrt.pop %v2009
      %v2012 = vrsqrt.pop %v2010
      %v2013 = vmul.f32 %v1998, %v2011
      %v2014 = vmul.f32 %v1999, %v2012
      %v2016 = vlaneseq
      %v2017 = vshrl.u32 %v2016, 7
      %v2018 = vsub.s32 0, %v2017
      %v2019 = vrot.slane %v2000, %v2018
      %v2021 = vmul.f32 %v2013, %v2019
      %v2022 = vmul.f32 %v2014, %v2019
      %v2023 = vpack.c.bf16 %v2022, %v2021
      %v2024 = vld [vmem:[%s427] sm:$0xf]
      %v2025 = vld [vmem:[%s427 + $0x4] sm:$0xf]
      %v2026 = vld [vmem:[%s427 + $0x8] sm:$0xf]
      %v2027 = vld [vmem:[%s427 + $0xc] sm:$0xf]
      %v2028 = vld [vmem:[%s427 + $0x10] sm:$0xf]
      %v2029 = vld [vmem:[%s427 + $0x14] sm:$0xf]
      %v2030 = vld [vmem:[%s427 + $0x18] sm:$0xf]
      %v2031 = vld [vmem:[%s427 + $0x1c] sm:$0xf]
      %v2032 = vld [vmem:[%s427 + $0x20] sm:$0xf]
      %v2033 = vld [vmem:[%s427 + $0x24] sm:$0xf]
      %v2034 = vld [vmem:[%s427 + $0x28] sm:$0xf]
      %v2035 = vld [vmem:[%s427 + $0x2c] sm:$0xf]
      %v2036 = vld [vmem:[%s427 + $0x30] sm:$0xf]
      %v2037 = vld [vmem:[%s427 + $0x34] sm:$0xf]
      %v2038 = vld [vmem:[%s427 + $0x38] sm:$0xf]
      %v2039 = vld [vmem:[%s427 + $0x3c] sm:$0xf]
      %v2056 = vunpack.c.l.b16 %v2024
      %v2057 = vunpack.c.l.b16 %v2025
      %v2058 = vunpack.c.l.b16 %v2026
      %v2059 = vunpack.c.l.b16 %v2027
      %v2060 = vunpack.c.l.b16 %v2028
      %v2061 = vunpack.c.l.b16 %v2029
      %v2062 = vunpack.c.l.b16 %v2030
      %v2063 = vunpack.c.l.b16 %v2031
      %v2064 = vunpack.c.l.b16 %v2032
      %v2065 = vunpack.c.l.b16 %v2033
      %v2066 = vunpack.c.l.b16 %v2034
      %v2067 = vunpack.c.l.b16 %v2035
      %v2068 = vunpack.c.l.b16 %v2036
      %v2069 = vunpack.c.l.b16 %v2037
      %v2070 = vunpack.c.l.b16 %v2038
      %v2071 = vunpack.c.l.b16 %v2039
      %v2072 = vpack.c.b16 %v2057, %v2056
      %v2073 = vpack.c.b16 %v2059, %v2058
      %v2074 = vpack.c.b16 %v2061, %v2060
      %v2075 = vpack.c.b16 %v2063, %v2062
      %v2076 = vpack.c.b16 %v2065, %v2064
      %v2077 = vpack.c.b16 %v2067, %v2066
      %v2078 = vpack.c.b16 %v2069, %v2068
      %v2079 = vpack.c.b16 %v2071, %v2070
      %2088 = vmatprep.subr.bf16.mxu0 0
      %2089 = vmatpush1.bf16.msra.mxu0 %v2072
      %2090 = vmatprep.subr.bf16.mxu0 0
      %2091 = vmatpush1.bf16.msra.mxu0 %v2073
      %2092 = vmatprep.subr.bf16.mxu0 0
      %2093 = vmatpush1.bf16.msra.mxu0 %v2074
      %2094 = vmatprep.subr.bf16.mxu0 0
      %2095 = vmatpush1.bf16.msra.mxu0 %v2075
      %2096 = vmatprep.subr.bf16.mxu0 0
      %2097 = vmatpush1.bf16.msra.mxu0 %v2076
      %2098 = vmatprep.subr.bf16.mxu0 0
      %2099 = vmatpush1.bf16.msra.mxu0 %v2077
      %2100 = vmatprep.subr.bf16.mxu0 0
      %2101 = vmatpush1.bf16.msra.mxu0 %v2078
      %2102 = vmatprep.subr.bf16.mxu0 0
      %2103 = vmatpush1.bf16.msra.mxu0 %v2079
      %2104 = vmatprep.subr.bf16.mxu0 0
      %2105 = vmatpush1.bf16.msra.mxu0 0
      %2106 = vmatprep.subr.bf16.mxu0 0
      %2107 = vmatpush1.bf16.msra.mxu0 0
      %2108 = vmatprep.subr.bf16.mxu0 0
      %2109 = vmatpush1.bf16.msra.mxu0 0
      %2110 = vmatprep.subr.bf16.mxu0 0
      %2111 = vmatpush1.bf16.msra.mxu0 0
      %2112 = vmatprep.subr.bf16.mxu0 0
      %2113 = vmatpush1.bf16.msra.mxu0 0
      %2114 = vmatprep.subr.bf16.mxu0 0
      %2115 = vmatpush1.bf16.msra.mxu0 0
      %2116 = vmatprep.subr.bf16.mxu0 0
      %2117 = vmatpush1.bf16.msra.mxu0 0
      %2118 = vmatprep.subr.bf16.mxu0 0
      %2119 = vmatpush1.bf16.msra.mxu0 0
      %2120 = vmatprep.mubr.bf16.mxu0 0
      %2121 = vmatmul.mubr.bf16.gmra.mrb[0].mxu0 %v2023
      %v2122 = vpop.f32.mrb[0].mxu0
      %v2123 = vadd.f32 0.0, %v2122
      %v2124 = vpop.f32.mrb[0].mxu0
      %v2125 = vpop.f32.mrb[0].mxu0
      %v2126 = vadd.f32 0.0, %v2125
      %v2127 = vpop.f32.mrb[0].mxu0
      %2128 = vdwg.mxu0
      %v2129 = vmax.f32 %v2123, 0.0
      %v2130 = vmax.f32 %v2126, 0.0
      %v2131 = vpack.c.bf16 %v2130, %v2129
      %v2132 = vld [vmem:[%s432] sm:$0xf]
      %v2133 = vld [vmem:[%s432 + $0x4] sm:$0xf]
      %v2134 = vld [vmem:[%s432 + $0x8] sm:$0xf]
      %v2135 = vld [vmem:[%s432 + $0xc] sm:$0xf]
      %v2136 = vld [vmem:[%s432 + $0x10] sm:$0xf]
      %v2137 = vld [vmem:[%s432 + $0x14] sm:$0xf]
      %v2138 = vld [vmem:[%s432 + $0x18] sm:$0xf]
      %v2139 = vld [vmem:[%s432 + $0x1c] sm:$0xf]
      %v2140 = vld [vmem:[%s432 + $0x20] sm:$0xf]
      %v2141 = vld [vmem:[%s432 + $0x24] sm:$0xf]
      %v2142 = vld [vmem:[%s432 + $0x28] sm:$0xf]
      %v2143 = vld [vmem:[%s432 + $0x2c] sm:$0xf]
      %v2144 = vld [vmem:[%s432 + $0x30] sm:$0xf]
      %v2145 = vld [vmem:[%s432 + $0x34] sm:$0xf]
      %v2146 = vld [vmem:[%s432 + $0x38] sm:$0xf]
      %v2147 = vld [vmem:[%s432 + $0x3c] sm:$0xf]
      %v2164 = vunpack.c.l.b16 %v2132
      %v2165 = vunpack.c.l.b16 %v2133
      %v2166 = vunpack.c.l.b16 %v2134
      %v2167 = vunpack.c.l.b16 %v2135
      %v2168 = vunpack.c.l.b16 %v2136
      %v2169 = vunpack.c.l.b16 %v2137
      %v2170 = vunpack.c.l.b16 %v2138
      %v2171 = vunpack.c.l.b16 %v2139
      %v2172 = vunpack.c.l.b16 %v2140
      %v2173 = vunpack.c.l.b16 %v2141
      %v2174 = vunpack.c.l.b16 %v2142
      %v2175 = vunpack.c.l.b16 %v2143
      %v2176 = vunpack.c.l.b16 %v2144
      %v2177 = vunpack.c.l.b16 %v2145
      %v2178 = vunpack.c.l.b16 %v2146
      %v2179 = vunpack.c.l.b16 %v2147
      %v2180 = vpack.c.b16 %v2165, %v2164
      %v2181 = vpack.c.b16 %v2167, %v2166
      %v2182 = vpack.c.b16 %v2169, %v2168
      %v2183 = vpack.c.b16 %v2171, %v2170
      %v2184 = vpack.c.b16 %v2173, %v2172
      %v2185 = vpack.c.b16 %v2175, %v2174
      %v2186 = vpack.c.b16 %v2177, %v2176
      %v2187 = vpack.c.b16 %v2179, %v2178
      %2196 = vmatprep.subr.bf16.mxu0 0
      %2197 = vmatpush1.bf16.msra.mxu0 %v2180
      %2198 = vmatprep.subr.bf16.mxu0 0
      %2199 = vmatpush1.bf16.msra.mxu0 %v2181
      %2200 = vmatprep.subr.bf16.mxu0 0
      %2201 = vmatpush1.bf16.msra.mxu0 %v2182
      %2202 = vmatprep.subr.bf16.mxu0 0
      %2203 = vmatpush1.bf16.msra.mxu0 %v2183
      %2204 = vmatprep.subr.bf16.mxu0 0
      %2205 = vmatpush1.bf16.msra.mxu0 %v2184
      %2206 = vmatprep.subr.bf16.mxu0 0
      %2207 = vmatpush1.bf16.msra.mxu0 %v2185
      %2208 = vmatprep.subr.bf16.mxu0 0
      %2209 = vmatpush1.bf16.msra.mxu0 %v2186
      %2210 = vmatprep.subr.bf16.mxu0 0
      %2211 = vmatpush1.bf16.msra.mxu0 %v2187
      %2212 = vmatprep.subr.bf16.mxu0 0
      %2213 = vmatpush1.bf16.msra.mxu0 0
      %2214 = vmatprep.subr.bf16.mxu0 0
      %2215 = vmatpush1.bf16.msra.mxu0 0
      %2216 = vmatprep.subr.bf16.mxu0 0
      %2217 = vmatpush1.bf16.msra.mxu0 0
      %2218 = vmatprep.subr.bf16.mxu0 0
      %2219 = vmatpush1.bf16.msra.mxu0 0
      %2220 = vmatprep.subr.bf16.mxu0 0
      %2221 = vmatpush1.bf16.msra.mxu0 0
      %2222 = vmatprep.subr.bf16.mxu0 0
      %2223 = vmatpush1.bf16.msra.mxu0 0
      %2224 = vmatprep.subr.bf16.mxu0 0
      %2225 = vmatpush1.bf16.msra.mxu0 0
      %2226 = vmatprep.subr.bf16.mxu0 0
      %2227 = vmatpush1.bf16.msra.mxu0 0
      %2228 = vmatprep.mubr.bf16.mxu0 0
      %2229 = vmatmul.mubr.bf16.gmra.mrb[0].mxu0 %v2131
      %v2230 = vpop.f32.mrb[0].mxu0
      %v2231 = vadd.f32 0.0, %v2230
      %v2232 = vpop.f32.mrb[0].mxu0
      %v2233 = vpop.f32.mrb[0].mxu0
      %v2234 = vadd.f32 0.0, %v2233
      %v2235 = vpop.f32.mrb[0].mxu0
      %2236 = vdwg.mxu0
      %v2237 = vadd.f32 %v1998, %v2231
      %v2238 = vadd.f32 %v1999, %v2234
      %2239 = vst [vmem:[#allocation2] sm:$0xff] %v2237
      %2240 = vst [vmem:[#allocation2 + $0x8] sm:$0xff] %v2238
      %p2241 = scmp.eq.s32.totalorder %s21, 1
      // Predicated region
      $region65: #{text_clip_forward.1} parent=59 // pred_check
        %p2242 = pneg %p2241
      $region66: #{text_clip_forward.1} parent=59 // pred_check_branch
        %2244 = sbr.rel (%p2242) target = $region68
      $region67: #{text_clip_forward.1} parent=59 // pred_region
        %v2245 = vld [vmem:[#allocation2] sm:$0xff]
        %v2246 = vld [vmem:[#allocation2 + $0x8] sm:$0xff]
        %v2247 = vld [vmem:[%s9] sm:$0x1]
        %v2248 = vmul.f32 %v2245, %v2245
        %v2249 = vmul.f32 %v2246, %v2246
        %2250 = vadd.xlane.f32.xlu0 %v2248
        %v2251 = vpop.xlane.xlu0 %2250
        %2252 = vadd.xlane.f32.xlu0 %v2249
        %v2253 = vpop.xlane.xlu0 %2252
        %v2254 = vmul.f32 %v2251, 0.03125
        %v2255 = vmul.f32 %v2253, 0.03125
        %v2256 = vadd.f32 %v2254, 1e-06
        %v2257 = vadd.f32 %v2255, 1e-06
        %v2258 = vrsqrt.pop %v2256
        %v2259 = vrsqrt.pop %v2257
        %v2260 = vmul.f32 %v2245, %v2258
        %v2261 = vmul.f32 %v2246, %v2259
        %v2263 = vlaneseq
        %v2264 = vshrl.u32 %v2263, 7
        %v2265 = vsub.s32 0, %v2264
        %v2266 = vrot.slane %v2247, %v2265
        %v2268 = vmul.f32 %v2260, %v2266
        %v2269 = vmul.f32 %v2261, %v2266
        %2270 = vst [vmem:[%s10] sm:$0xff] %v2268
        %2271 = vst [vmem:[%s10 + $0x8] sm:$0xff] %v2269
      $region68: #{text_clip_forward.1} parent=59 // pred_fallthru
        _
      // Predicated region
      $region69: #{text_clip_forward.1} parent=59 // pred_check
        %p2272 = pneg %p274
      $region70: #{text_clip_forward.1} parent=59 // pred_check_branch
        %2274 = sbr.rel (%p2272) target = $region72
      $region71: #{text_clip_forward.1} parent=59 // pred_region
        _
      $region72: #{text_clip_forward.1} parent=59 // pred_fallthru
        _
      // Predicated region
      $region73: #{text_clip_forward.1} parent=59 // pred_check
        %p2275 = pneg %p274
      $region74: #{text_clip_forward.1} parent=59 // pred_check_branch
        %2277 = sbr.rel (%p2275) target = $region76
      $region75: #{text_clip_forward.1} parent=59 // pred_region
        _
      $region76: #{text_clip_forward.1} parent=59 // pred_fallthru
        _
    $region60: #{text_clip_forward.1} parent=5 // pred_fallthru
      _
    %p2278 = scmp.le.s32.totalorder 2, %s16
    // Predicated region
    $region77: #{text_clip_forward.1} parent=5 // pred_check
      %p2279 = pneg %p2278
    $region78: #{text_clip_forward.1} parent=5 // pred_check_branch
      %2281 = sbr.rel (%p2279) target = $region80
    $region79: #{text_clip_forward.1} parent=5 // pred_region
      %s2282 = ssub.s32 %s16, 2
    $region80: #{text_clip_forward.1} parent=5 // pred_fallthru
      _
  $region6: #{text_clip_forward.1} parent=0 // loop_footer
    %s20 = sadd.s32 1, %s16
  $region7: #{text_clip_forward.1} parent=0 // loop_footer_branch
    %15 = sbr.rel target = $region3
  $region8: #{text_clip_forward.1} parent=0 // loop_exit
    _

</llo_original>
